<compile_context>
chip_gen: v7x
topology: tpu7x:2x2x1
jax: 0.10.0
libtpu: 0.0.40
codegen_flags: <defaults>
</compile_context>

<pallas_src>
import jax
import jax.numpy as jnp
import numpy as np
from jax.experimental import pallas as pl
from jax.experimental.pallas import tpu as pltpu


EYESIGHT = 11
STATE_SIZE = 2 * EYESIGHT ** 2        # 242
STATE_PAD = 256                       # lane-aligned K for fc1
LAYER_SIZE = 1024
ACTION_SIZE = 4
HEAD_PAD = 128                        # fused (policy | policy-dup | value | zeros) head width
OUT_LANES = 128                       # single lane-dense output slab

# output slab lane layout
_P0 = 0                               # probs    -> lanes [0, 4)
_L0 = ACTION_SIZE                     # log-prob -> lanes [4, 8)
_V = 2 * ACTION_SIZE                  # value    -> lane 8
_E = 2 * ACTION_SIZE + 1              # entropy  -> lane 9


def _net_kernel(x_ref, w1_ref, b1_ref, w2_ref, b2_ref, out_ref):
    # fc1 (bf16 operands, f32 accumulate) + bias + relu -> (Bt, 1024) f32
    h = jnp.dot(x_ref[...], w1_ref[...], preferred_element_type=jnp.float32)
    h = jnp.maximum(h + b1_ref[...], 0.0)

    # fused head matmul -> (Bt, 128):
    #   lanes 0:4 = policy logits, lanes 4:8 = policy logits (duplicate),
    #   lane 8 = value, lanes 9:128 = zero padding
    head = jnp.dot(h, w2_ref[...], preferred_element_type=jnp.float32) + b2_ref[...]

    lane = jax.lax.broadcasted_iota(jnp.int32, head.shape, 1)
    is_prob_lane = lane < ACTION_SIZE                           # lanes 0:4
    is_logp_lane = (lane >= _L0) & (lane < _L0 + ACTION_SIZE)   # lanes 4:8 (duplicated logits)

    # numerically-stable softmax over the first ACTION_SIZE lanes
    m = jnp.max(jnp.where(is_prob_lane, head, -1e30), axis=-1, keepdims=True)
    e = jnp.where(is_prob_lane, jnp.exp(head - m), 0.0)
    s = jnp.sum(e, axis=-1, keepdims=True)
    probs = e * pl.reciprocal(s, approx=True)                   # zero outside lanes 0:4
    log_s = jnp.log(s)
    # log-probs written directly into lanes 4:8 using the duplicated logits there
    logp_lanes = jnp.where(is_logp_lane, head - m - log_s, 0.0)
    # aligned (lanes 0:4) copy of log-probs just for the entropy reduction
    logp_aligned = jnp.where(is_prob_lane, head - m - log_s, 0.0)
    ent = -jnp.sum(probs * logp_aligned, axis=-1, keepdims=True)   # (Bt, 1)
    value = jnp.sum(jnp.where(lane == _V, head, 0.0),
                    axis=-1, keepdims=True)                        # (Bt, 1)

    # assemble the lane-dense output slab, one full-width store
    out = probs + logp_lanes
    out = out + jnp.where(lane == _V, value, 0.0)
    out = out + jnp.where(lane == _E, ent, 0.0)
    out_ref[...] = out


def _round_up(v, m):
    return (v + m - 1) // m * m


def net_pallas(x_flat, kernel_params):
    """x_flat: (B, STATE_SIZE) f32.  Returns a (B, 128) slab:
       [:,0:4]=probs, [:,4:8]=log-probs, [:,8]=value, [:,9]=entropy."""
    w1, b1, w2, b2 = kernel_params
    B = x_flat.shape[0]

    # batch tiling: Bt <= 256 keeps per-tile VMEM tiny even on v7x (64 MiB VMEM)
    Bp = _round_up(B, 16)
    Bt = Bp if Bp <= 256 else 256
    Bp = _round_up(Bp, Bt)
    n_blocks = Bp // Bt

    # pad batch + K, cast activations to bf16 (weights are pre-cast)
    x_pad = jnp.zeros((Bp, STATE_PAD), jnp.bfloat16)
    x_pad = x_pad.at[:B, :STATE_SIZE].set(x_flat.astype(jnp.bfloat16))

    slab = pl.pallas_call(
        _net_kernel,
        out_shape=jax.ShapeDtypeStruct((Bp, OUT_LANES), jnp.float32),
        grid_spec=pltpu.PrefetchScalarGridSpec(
            num_scalar_prefetch=0,
            grid=(n_blocks,),
            in_specs=[
                pl.BlockSpec((Bt, STATE_PAD), lambda i: (i, 0)),          # x tile
                pl.BlockSpec((STATE_PAD, LAYER_SIZE), lambda i: (0, 0)),  # w1 (resident)
                pl.BlockSpec((1, LAYER_SIZE), lambda i: (0, 0)),          # b1
                pl.BlockSpec((LAYER_SIZE, HEAD_PAD), lambda i: (0, 0)),   # fused w2
                pl.BlockSpec((1, HEAD_PAD), lambda i: (0, 0)),            # fused b2
            ],
            out_specs=pl.BlockSpec((Bt, OUT_LANES), lambda i: (i, 0)),
        ),
        compiler_params=pltpu.CompilerParams(
            dimension_semantics=("parallel",),
        ),
    )(x_pad, w1, b1, w2, b2)

    return slab[:B]


def net_forward(x, kernel_params, sample_key):
    """Matches Net.forward: returns (action, log_prob(action), entropy, value)."""
    B = x.shape[0]
    x_flat = x.astype(jnp.float32).reshape(B, -1)        # torch.flatten(x, 1)
    slab = net_pallas(x_flat, kernel_params)

    logp = slab[:, _L0:_L0 + ACTION_SIZE]                # (B, 4)
    entropy = slab[:, _E]                                # (B,)
    value = slab[:, _V]                                  # torch.squeeze(value, 1)

    # Categorical(probs=policy).sample()  -- tiny random glue, not the hot path
    action = jax.random.categorical(sample_key, logp, axis=-1)             # (B,)
    log_prob = jnp.take_along_axis(logp, action[:, None], axis=-1)[:, 0]   # (B,)
    return action, log_prob, entropy, value


def init_params(key):
    """Synthetic torch-layout weights (w stored transposed so the kernel does x @ W)."""
    k1, k2, k3, k4, k5, k6 = jax.random.split(key, 6)
    s1 = 1.0 / jnp.sqrt(STATE_SIZE)
    s2 = 1.0 / jnp.sqrt(LAYER_SIZE)
    w1 = jax.random.uniform(k1, (STATE_SIZE, LAYER_SIZE), jnp.float32, -s1, s1)
    b1 = jax.random.uniform(k2, (LAYER_SIZE,), jnp.float32, -s1, s1)
    w2p = jax.random.uniform(k3, (LAYER_SIZE, ACTION_SIZE), jnp.float32, -s2, s2)
    b2p = jax.random.uniform(k4, (ACTION_SIZE,), jnp.float32, -s2, s2)
    w2v = jax.random.uniform(k5, (LAYER_SIZE, 1), jnp.float32, -s2, s2)
    b2v = jax.random.uniform(k6, (1,), jnp.float32, -s2, s2)
    return (w1, b1, w2p, b2p, w2v, b2v)


def prepare_params(raw):
    """Layout plumbing: pad K, fuse + duplicate the heads, cast fc1 weight to bf16."""
    w1, b1, w2p, b2p, w2v, b2v = raw
    w1_pad = jnp.zeros((STATE_PAD, LAYER_SIZE), jnp.float32).at[:STATE_SIZE].set(w1)
    w1_bf16 = w1_pad.astype(jnp.bfloat16)
    b1_k = b1.reshape(1, LAYER_SIZE).astype(jnp.float32)

    # fused head: lanes 0:4 policy, lanes 4:8 policy (duplicate, becomes log-probs),
    #             lane 8 value, rest zero
    w2 = jnp.zeros((LAYER_SIZE, HEAD_PAD), jnp.float32)
    w2 = w2.at[:, _P0:_P0 + ACTION_SIZE].set(w2p)
    w2 = w2.at[:, _L0:_L0 + ACTION_SIZE].set(w2p)
    w2 = w2.at[:, _V:_V + 1].set(w2v)
    b2 = jnp.zeros((1, HEAD_PAD), jnp.float32)
    b2 = b2.at[0, _P0:_P0 + ACTION_SIZE].set(b2p)
    b2 = b2.at[0, _L0:_L0 + ACTION_SIZE].set(b2p)
    b2 = b2.at[0, _V].set(b2v[0])
    return (w1_bf16, b1_k, w2, b2)


def _reference(x_flat, raw):
    """Plain-JAX f32 reference matching the torch module."""
    w1, b1, w2p, b2p, w2v, b2v = raw
    h = jnp.maximum(x_flat @ w1 + b1, 0.0)
    logits = h @ w2p + b2p
    value = (h @ w2v + b2v)[:, 0]
    logp = jax.nn.log_softmax(logits, axis=-1)
    probs = jnp.exp(logp)
    ent = -jnp.sum(probs * logp, axis=-1)
    return probs, logp, value, ent


if __name__ == "__main__":
    key = jax.random.PRNGKey(0)
    k_params, k_x, k_sample = jax.random.split(key, 3)

    B = 2
    raw = init_params(k_params)
    params = prepare_params(raw)
    # synthetic observation: (B, 2, 11, 11) -> flattens to state_size = 242
    x = jax.random.normal(k_x, (B, 2, EYESIGHT, EYESIGHT), jnp.float32)

    action, log_prob, entropy, value = jax.jit(net_forward)(x, params, k_sample)
    jax.block_until_ready((action, log_prob, entropy, value))

    assert action.shape == (B,)
    assert log_prob.shape == (B,)
    assert entropy.shape == (B,)
    assert value.shape == (B,)

    # numeric sanity vs plain-JAX f32 reference (loose tol: fc1 runs with bf16 operands)
    x_flat = x.reshape(B, -1)
    slab = net_pallas(x_flat, params)
    ref_probs, ref_logp, ref_value, ref_ent = _reference(x_flat, raw)
    np.testing.assert_allclose(np.asarray(slab[:, _P0:_P0 + ACTION_SIZE]), np.asarray(ref_probs), atol=5e-2)
    np.testing.assert_allclose(np.asarray(slab[:, _L0:_L0 + ACTION_SIZE]), np.asarray(ref_logp), atol=5e-2)
    np.testing.assert_allclose(np.asarray(slab[:, _V]), np.asarray(ref_value), atol=5e-2)
    np.testing.assert_allclose(np.asarray(slab[:, _E]), np.asarray(ref_ent), atol=5e-2)

    print("KERNEL_OK")
</pallas_src>

<mosaic_0001>
module attributes {stable_mosaic.version = 11 : i64} {
  func.func @_net_kernel(%arg0: i32, %arg1: memref<16x256xbf16, #tpu.memory_space<vmem>>, %arg2: memref<256x1024xbf16, #tpu.memory_space<vmem>>, %arg3: memref<1x1024xf32, #tpu.memory_space<vmem>>, %arg4: memref<1024x128xf32, #tpu.memory_space<vmem>>, %arg5: memref<1x128xf32, #tpu.memory_space<vmem>>, %arg6: memref<16x128xf32, #tpu.memory_space<vmem>>) attributes {dimension_semantics = [#tpu.dimension_semantics<parallel>], iteration_bounds = array<i64: 1>, scalar_prefetch = 0 : i64, scratch_operands = 0 : i64, tpu.core_type = #tpu.core_type<tc>, window_params = [{transform_indices = @transform_0, window_bounds = array<i64: 16, 256>}, {pipeline_mode = #tpu.pipeline_mode<synchronous>, transform_indices = @transform_1, window_bounds = array<i64: 256, 1024>}, {pipeline_mode = #tpu.pipeline_mode<synchronous>, transform_indices = @transform_2, window_bounds = array<i64: 1, 1024>}, {pipeline_mode = #tpu.pipeline_mode<synchronous>, transform_indices = @transform_3, window_bounds = array<i64: 1024, 128>}, {pipeline_mode = #tpu.pipeline_mode<synchronous>, transform_indices = @transform_4, window_bounds = array<i64: 1, 128>}, {transform_indices = @transform_5, window_bounds = array<i64: 16, 128>}]} {
    %c0 = arith.constant 0 : index
    %c0_0 = arith.constant 0 : index
    %0 = vector.load %arg1[%c0, %c0_0] : memref<16x256xbf16, #tpu.memory_space<vmem>>, vector<16x256xbf16>
    %c0_1 = arith.constant 0 : index
    %c0_2 = arith.constant 0 : index
    %1 = vector.load %arg2[%c0_1, %c0_2] : memref<256x1024xbf16, #tpu.memory_space<vmem>>, vector<256x1024xbf16>
    %cst = arith.constant dense<0.000000e+00> : vector<16x1024xf32>
    %2 = tpu.matmul %0, %1, %cst {dimension_numbers = #tpu.dot_dimension_numbers<[1], [0], [0], [1], [0, 0, 1, 1], [], []>} : vector<16x256xbf16>, vector<256x1024xbf16>, vector<16x1024xf32> -> vector<16x1024xf32>
    %c0_3 = arith.constant 0 : index
    %c0_4 = arith.constant 0 : index
    %3 = vector.load %arg3[%c0_3, %c0_4] : memref<1x1024xf32, #tpu.memory_space<vmem>>, vector<1x1024xf32>
    %4 = vector.broadcast %3 : vector<1x1024xf32> to vector<16x1024xf32>
    %5 = arith.addf %2, %4 : vector<16x1024xf32>
    %cst_5 = arith.constant 0.000000e+00 : f32
    %6 = vector.broadcast %cst_5 : f32 to vector<16x1024xf32>
    %7 = arith.maximumf %5, %6 : vector<16x1024xf32>
    %c0_6 = arith.constant 0 : index
    %c0_7 = arith.constant 0 : index
    %8 = vector.load %arg4[%c0_6, %c0_7] : memref<1024x128xf32, #tpu.memory_space<vmem>>, vector<1024x128xf32>
    %cst_8 = arith.constant dense<0.000000e+00> : vector<16x128xf32>
    %9 = tpu.matmul %7, %8, %cst_8 {dimension_numbers = #tpu.dot_dimension_numbers<[1], [0], [0], [1], [0, 0, 1, 1], [], []>} : vector<16x1024xf32>, vector<1024x128xf32>, vector<16x128xf32> -> vector<16x128xf32>
    %c0_9 = arith.constant 0 : index
    %c0_10 = arith.constant 0 : index
    %10 = vector.load %arg5[%c0_9, %c0_10] : memref<1x128xf32, #tpu.memory_space<vmem>>, vector<1x128xf32>
    %11 = vector.broadcast %10 : vector<1x128xf32> to vector<16x128xf32>
    %12 = arith.addf %9, %11 : vector<16x128xf32>
    %13 = tpu.iota {dimensions = array<i32: 1>} : vector<16x128xi32>
    %c4_i32 = arith.constant 4 : i32
    %14 = vector.broadcast %c4_i32 : i32 to vector<16x128xi32>
    %15 = arith.cmpi slt, %13, %14 : vector<16x128xi32>
    %c4_i32_11 = arith.constant 4 : i32
    %16 = vector.broadcast %c4_i32_11 : i32 to vector<16x128xi32>
    %17 = arith.cmpi sge, %13, %16 : vector<16x128xi32>
    %c8_i32 = arith.constant 8 : i32
    %18 = vector.broadcast %c8_i32 : i32 to vector<16x128xi32>
    %19 = arith.cmpi slt, %13, %18 : vector<16x128xi32>
    %20 = arith.andi %17, %19 : vector<16x128xi1>
    %cst_12 = arith.constant -1.000000e+30 : f32
    %21 = vector.broadcast %cst_12 : f32 to vector<16x128xf32>
    %22 = arith.select %15, %12, %21 : vector<16x128xi1>, vector<16x128xf32>
    %cst_13 = arith.constant dense<0xFF800000> : vector<16xf32>
    %23 = vector.multi_reduction <maximumf>, %22, %cst_13 [1] : vector<16x128xf32> to vector<16xf32>
    %24 = vector.shape_cast %23 : vector<16xf32> to vector<16x1xf32>
    %25 = vector.broadcast %24 : vector<16x1xf32> to vector<16x128xf32>
    %26 = arith.subf %12, %25 : vector<16x128xf32>
    %27 = math.exp %26 : vector<16x128xf32>
    %cst_14 = arith.constant 0.000000e+00 : f32
    %28 = vector.broadcast %cst_14 : f32 to vector<16x128xf32>
    %29 = arith.select %15, %27, %28 : vector<16x128xi1>, vector<16x128xf32>
    %cst_15 = arith.constant dense<0.000000e+00> : vector<16xf32>
    %30 = vector.multi_reduction <add>, %29, %cst_15 [1] : vector<16x128xf32> to vector<16xf32>
    %31 = vector.shape_cast %30 : vector<16xf32> to vector<16x1xf32>
    %32 = tpu.reciprocal %31 {approx = true} : vector<16x1xf32> -> vector<16x1xf32>
    %33 = vector.broadcast %32 : vector<16x1xf32> to vector<16x128xf32>
    %34 = arith.mulf %29, %33 : vector<16x128xf32>
    %35 = math.log %31 : vector<16x1xf32>
    %36 = vector.broadcast %24 : vector<16x1xf32> to vector<16x128xf32>
    %37 = arith.subf %12, %36 : vector<16x128xf32>
    %38 = vector.broadcast %35 : vector<16x1xf32> to vector<16x128xf32>
    %39 = arith.subf %37, %38 : vector<16x128xf32>
    %cst_16 = arith.constant 0.000000e+00 : f32
    %40 = vector.broadcast %cst_16 : f32 to vector<16x128xf32>
    %41 = arith.select %20, %39, %40 : vector<16x128xi1>, vector<16x128xf32>
    %42 = vector.broadcast %24 : vector<16x1xf32> to vector<16x128xf32>
    %43 = arith.subf %12, %42 : vector<16x128xf32>
    %44 = vector.broadcast %35 : vector<16x1xf32> to vector<16x128xf32>
    %45 = arith.subf %43, %44 : vector<16x128xf32>
    %cst_17 = arith.constant 0.000000e+00 : f32
    %46 = vector.broadcast %cst_17 : f32 to vector<16x128xf32>
    %47 = arith.select %15, %45, %46 : vector<16x128xi1>, vector<16x128xf32>
    %48 = arith.mulf %34, %47 : vector<16x128xf32>
    %cst_18 = arith.constant dense<0.000000e+00> : vector<16xf32>
    %49 = vector.multi_reduction <add>, %48, %cst_18 [1] : vector<16x128xf32> to vector<16xf32>
    %50 = vector.shape_cast %49 : vector<16xf32> to vector<16x1xf32>
    %cst_19 = arith.constant 0.000000e+00 : f32
    %51 = vector.broadcast %cst_19 : f32 to vector<16x1xf32>
    %52 = arith.subf %51, %50 : vector<16x1xf32>
    %c8_i32_20 = arith.constant 8 : i32
    %53 = vector.broadcast %c8_i32_20 : i32 to vector<16x128xi32>
    %54 = arith.cmpi eq, %13, %53 : vector<16x128xi32>
    %cst_21 = arith.constant 0.000000e+00 : f32
    %55 = vector.broadcast %cst_21 : f32 to vector<16x128xf32>
    %56 = arith.select %54, %12, %55 : vector<16x128xi1>, vector<16x128xf32>
    %cst_22 = arith.constant dense<0.000000e+00> : vector<16xf32>
    %57 = vector.multi_reduction <add>, %56, %cst_22 [1] : vector<16x128xf32> to vector<16xf32>
    %58 = vector.shape_cast %57 : vector<16xf32> to vector<16x1xf32>
    %59 = arith.addf %34, %41 : vector<16x128xf32>
    %c8_i32_23 = arith.constant 8 : i32
    %60 = vector.broadcast %c8_i32_23 : i32 to vector<16x128xi32>
    %61 = arith.cmpi eq, %13, %60 : vector<16x128xi32>
    %cst_24 = arith.constant 0.000000e+00 : f32
    %62 = vector.shape_cast %58 : vector<16x1xf32> to vector<16x1xf32>
    %63 = vector.broadcast %62 : vector<16x1xf32> to vector<16x128xf32>
    %64 = vector.broadcast %cst_24 : f32 to vector<16x128xf32>
    %65 = arith.select %61, %63, %64 : vector<16x128xi1>, vector<16x128xf32>
    %66 = arith.addf %59, %65 : vector<16x128xf32>
    %c9_i32 = arith.constant 9 : i32
    %67 = vector.broadcast %c9_i32 : i32 to vector<16x128xi32>
    %68 = arith.cmpi eq, %13, %67 : vector<16x128xi32>
    %cst_25 = arith.constant 0.000000e+00 : f32
    %69 = vector.shape_cast %52 : vector<16x1xf32> to vector<16x1xf32>
    %70 = vector.broadcast %69 : vector<16x1xf32> to vector<16x128xf32>
    %71 = vector.broadcast %cst_25 : f32 to vector<16x128xf32>
    %72 = arith.select %68, %70, %71 : vector<16x128xi1>, vector<16x128xf32>
    %73 = arith.addf %66, %72 : vector<16x128xf32>
    %c0_26 = arith.constant 0 : index
    %c0_27 = arith.constant 0 : index
    %74 = vector.load %arg6[%c0_26, %c0_27] : memref<16x128xf32, #tpu.memory_space<vmem>>, vector<16x128xf32>
    tpu.vector_store %arg6[%c0_26, %c0_27], %73 {strides = array<i32>} : memref<16x128xf32, #tpu.memory_space<vmem>>, vector<16x128xf32>,
    return
  }
  func.func @transform_0(%arg0: i32) -> (i32, i32) {
    %c0_i32 = arith.constant 0 : i32
    %c0_i32_0 = arith.constant 0 : i32
    return %arg0, %c0_i32 : i32, i32
  }
  func.func @transform_1(%arg0: i32) -> (i32, i32) {
    %c0_i32 = arith.constant 0 : i32
    %c0_i32_0 = arith.constant 0 : i32
    %c0_i32_1 = arith.constant 0 : i32
    return %c0_i32, %c0_i32_0 : i32, i32
  }
  func.func @transform_2(%arg0: i32) -> (i32, i32) {
    %c0_i32 = arith.constant 0 : i32
    %c0_i32_0 = arith.constant 0 : i32
    %c0_i32_1 = arith.constant 0 : i32
    return %c0_i32, %c0_i32_0 : i32, i32
  }
  func.func @transform_3(%arg0: i32) -> (i32, i32) {
    %c0_i32 = arith.constant 0 : i32
    %c0_i32_0 = arith.constant 0 : i32
    %c0_i32_1 = arith.constant 0 : i32
    return %c0_i32, %c0_i32_0 : i32, i32
  }
  func.func @transform_4(%arg0: i32) -> (i32, i32) {
    %c0_i32 = arith.constant 0 : i32
    %c0_i32_0 = arith.constant 0 : i32
    %c0_i32_1 = arith.constant 0 : i32
    return %c0_i32, %c0_i32_0 : i32, i32
  }
  func.func @transform_5(%arg0: i32) -> (i32, i32) {
    %c0_i32 = arith.constant 0 : i32
    %c0_i32_0 = arith.constant 0 : i32
    return %arg0, %c0_i32 : i32, i32
  }
}

</mosaic_0001>

<llo_original>
// kernel: net_forward.1
$region0: #{net_forward.1}
  #allocation0 [shape = 'u32[]', space=smem, size = 0x4, offset = 0x4, fixed_abs, tag = 'smem constant byte address 0x4 - core index']
  #allocation1 [shape = 'u32[144,128]{1,0:T(1,128)}', space=vmem, size = 0x12000, scoped, tag = 'internal scratch']
  %s0 = inlined_call_operand.vmem [shape: bf16[16,256], index: 0, kind: input, shape index: {}]
  %s1 = inlined_call_operand.hbm [shape: bf16[256,1024], index: 1, kind: input, shape index: {}]
  %s2 = inlined_call_operand.vmem [shape: f32[1,1024], index: 2, kind: input, shape index: {}]
  %s3 = inlined_call_operand.hbm [shape: f32[1024,128], index: 3, kind: input, shape index: {}]
  %s4 = inlined_call_operand.vmem [shape: f32[1,128], index: 4, kind: input, shape index: {}]
  %s5 = inlined_call_operand.vmem [shape: f32[16,128], index: 5, kind: output, shape index: {}]
  %s6 = sld [smem:[#allocation0]]
  $region38: #{net_forward.1} parent=0
    _
  %s8 = ssub.s32 1, %s6
  %s9 = scalar_select 0, %s8, %s6
  $region1: #{net_forward.1} parent=0
    #allocation2 [shape = 'u8[524288]{0}', space=vmem, size = 0x80000, scoped, tag = 'input window, operand 1, single buffered']
    #allocation3 [shape = 's32[1]{0}', space=sflag, size = 0x4, scoped, tag = 'scoped memory for net_forward.1']
    #allocation4 [shape = 'u8[524288]{0}', space=vmem, size = 0x80000, scoped, tag = 'input window, operand 3, single buffered']
    #allocation5 [shape = 's32[1]{0}', space=sflag, size = 0x4, scoped, tag = 'scoped memory for net_forward.1']
    %10 = vsyncpa [#allocation3], 0
    %11 = vsyncpa [#allocation5], 0
    // Predicated region
    $region2: #{net_forward.1} parent=1 // pred_check
      _
    $region3: #{net_forward.1} parent=1 // pred_check_branch
      %13 = sbr.rel (0) target = $region5
    $region4: #{net_forward.1} parent=1 // pred_region
      _
    $region5: #{net_forward.1} parent=1 // pred_fallthru
      _
    // Predicated region
    $region6: #{net_forward.1} parent=1 // pred_check
      _
    $region7: #{net_forward.1} parent=1 // pred_check_branch
      %15 = sbr.rel (0) target = $region9
    $region8: #{net_forward.1} parent=1 // pred_region
      %s17 = ssub.s32 16384, 16384
      %18 = vsyncadd [#allocation3], %s17
      %s19 = sshll.u32 [#allocation2], 4
      %s20 = int_to_ptr.vmem [resolvable:$true] %s19
      %25 = dma.hbm_to_vmem [thread:$0]  %s1, 16384, %s20, [#allocation3], 512, 512, 32
    $region9: #{net_forward.1} parent=1 // pred_fallthru
      _
    // Predicated region
    $region10: #{net_forward.1} parent=1 // pred_check
      _
    $region11: #{net_forward.1} parent=1 // pred_check_branch
      %27 = sbr.rel (0) target = $region13
    $region12: #{net_forward.1} parent=1 // pred_region
      _
    $region13: #{net_forward.1} parent=1 // pred_fallthru
      _
    // Predicated region
    $region14: #{net_forward.1} parent=1 // pred_check
      _
    $region15: #{net_forward.1} parent=1 // pred_check_branch
      %29 = sbr.rel (0) target = $region17
    $region16: #{net_forward.1} parent=1 // pred_region
      %s31 = ssub.s32 16384, 16384
      %32 = vsyncadd [#allocation5], %s31
      %s33 = sshll.u32 [#allocation4], 4
      %s34 = int_to_ptr.vmem [resolvable:$true] %s33
      %39 = dma.hbm_to_vmem [thread:$0]  %s3, 16384, %s34, [#allocation5], 128, 128, 8
    $region17: #{net_forward.1} parent=1 // pred_fallthru
      _
    // Predicated region
    $region18: #{net_forward.1} parent=1 // pred_check
      _
    $region19: #{net_forward.1} parent=1 // pred_check_branch
      %41 = sbr.rel (0) target = $region21
    $region20: #{net_forward.1} parent=1 // pred_region
      _
    $region21: #{net_forward.1} parent=1 // pred_fallthru
      _
    // Predicated region
    $region22: #{net_forward.1} parent=1 // pred_check
      _
    $region23: #{net_forward.1} parent=1 // pred_check_branch
      %43 = sbr.rel (0) target = $region25
    $region24: #{net_forward.1} parent=1 // pred_region
      %44 = dma.done [#allocation3], 16384
    $region25: #{net_forward.1} parent=1 // pred_fallthru
      _
    // Predicated region
    $region26: #{net_forward.1} parent=1 // pred_check
      _
    $region27: #{net_forward.1} parent=1 // pred_check_branch
      %46 = sbr.rel (0) target = $region29
    $region28: #{net_forward.1} parent=1 // pred_region
      %47 = dma.done [#allocation5], 16384
    $region29: #{net_forward.1} parent=1 // pred_fallthru
      _
    %v48 = vld [vmem:[%s0] sm:$0xff]
    %v49 = vld [vmem:[%s0 + $0x8] sm:$0xff]
    %v50 = vld [vmem:[#allocation2] sm:$0xff]
    %v51 = vld [vmem:[#allocation2 + $0x8] sm:$0xff]
    %v52 = vld [vmem:[#allocation2 + $0x10] sm:$0xff]
    %v53 = vld [vmem:[#allocation2 + $0x18] sm:$0xff]
    %v54 = vld [vmem:[#allocation2 + $0x20] sm:$0xff]
    %v55 = vld [vmem:[#allocation2 + $0x28] sm:$0xff]
    %v56 = vld [vmem:[#allocation2 + $0x30] sm:$0xff]
    %v57 = vld [vmem:[#allocation2 + $0x38] sm:$0xff]
    %v58 = vld [vmem:[#allocation2 + $0x40] sm:$0xff]
    %v59 = vld [vmem:[#allocation2 + $0x48] sm:$0xff]
    %v60 = vld [vmem:[#allocation2 + $0x50] sm:$0xff]
    %v61 = vld [vmem:[#allocation2 + $0x58] sm:$0xff]
    %v62 = vld [vmem:[#allocation2 + $0x60] sm:$0xff]
    %v63 = vld [vmem:[#allocation2 + $0x68] sm:$0xff]
    %v64 = vld [vmem:[#allocation2 + $0x70] sm:$0xff]
    %v65 = vld [vmem:[#allocation2 + $0x78] sm:$0xff]
    %v66 = vld [vmem:[#allocation2 + $0x80] sm:$0xff]
    %v67 = vld [vmem:[#allocation2 + $0x88] sm:$0xff]
    %v68 = vld [vmem:[#allocation2 + $0x90] sm:$0xff]
    %v69 = vld [vmem:[#allocation2 + $0x98] sm:$0xff]
    %v70 = vld [vmem:[#allocation2 + $0xa0] sm:$0xff]
    %v71 = vld [vmem:[#allocation2 + $0xa8] sm:$0xff]
    %v72 = vld [vmem:[#allocation2 + $0xb0] sm:$0xff]
    %v73 = vld [vmem:[#allocation2 + $0xb8] sm:$0xff]
    %v74 = vld [vmem:[#allocation2 + $0xc0] sm:$0xff]
    %v75 = vld [vmem:[#allocation2 + $0xc8] sm:$0xff]
    %v76 = vld [vmem:[#allocation2 + $0xd0] sm:$0xff]
    %v77 = vld [vmem:[#allocation2 + $0xd8] sm:$0xff]
    %v78 = vld [vmem:[#allocation2 + $0xe0] sm:$0xff]
    %v79 = vld [vmem:[#allocation2 + $0xe8] sm:$0xff]
    %v80 = vld [vmem:[#allocation2 + $0xf0] sm:$0xff]
    %v81 = vld [vmem:[#allocation2 + $0xf8] sm:$0xff]
    %v82 = vld [vmem:[#allocation2 + $0x100] sm:$0xff]
    %v83 = vld [vmem:[#allocation2 + $0x108] sm:$0xff]
    %v84 = vld [vmem:[#allocation2 + $0x110] sm:$0xff]
    %v85 = vld [vmem:[#allocation2 + $0x118] sm:$0xff]
    %v86 = vld [vmem:[#allocation2 + $0x120] sm:$0xff]
    %v87 = vld [vmem:[#allocation2 + $0x128] sm:$0xff]
    %v88 = vld [vmem:[#allocation2 + $0x130] sm:$0xff]
    %v89 = vld [vmem:[#allocation2 + $0x138] sm:$0xff]
    %v90 = vld [vmem:[#allocation2 + $0x140] sm:$0xff]
    %v91 = vld [vmem:[#allocation2 + $0x148] sm:$0xff]
    %v92 = vld [vmem:[#allocation2 + $0x150] sm:$0xff]
    %v93 = vld [vmem:[#allocation2 + $0x158] sm:$0xff]
    %v94 = vld [vmem:[#allocation2 + $0x160] sm:$0xff]
    %v95 = vld [vmem:[#allocation2 + $0x168] sm:$0xff]
    %v96 = vld [vmem:[#allocation2 + $0x170] sm:$0xff]
    %v97 = vld [vmem:[#allocation2 + $0x178] sm:$0xff]
    %v98 = vld [vmem:[#allocation2 + $0x180] sm:$0xff]
    %v99 = vld [vmem:[#allocation2 + $0x188] sm:$0xff]
    %v100 = vld [vmem:[#allocation2 + $0x190] sm:$0xff]
    %v101 = vld [vmem:[#allocation2 + $0x198] sm:$0xff]
    %v102 = vld [vmem:[#allocation2 + $0x1a0] sm:$0xff]
    %v103 = vld [vmem:[#allocation2 + $0x1a8] sm:$0xff]
    %v104 = vld [vmem:[#allocation2 + $0x1b0] sm:$0xff]
    %v105 = vld [vmem:[#allocation2 + $0x1b8] sm:$0xff]
    %v106 = vld [vmem:[#allocation2 + $0x1c0] sm:$0xff]
    %v107 = vld [vmem:[#allocation2 + $0x1c8] sm:$0xff]
    %v108 = vld [vmem:[#allocation2 + $0x1d0] sm:$0xff]
    %v109 = vld [vmem:[#allocation2 + $0x1d8] sm:$0xff]
    %v110 = vld [vmem:[#allocation2 + $0x1e0] sm:$0xff]
    %v111 = vld [vmem:[#allocation2 + $0x1e8] sm:$0xff]
    %v112 = vld [vmem:[#allocation2 + $0x1f0] sm:$0xff]
    %v113 = vld [vmem:[#allocation2 + $0x1f8] sm:$0xff]
    %v114 = vld [vmem:[#allocation2 + $0x200] sm:$0xff]
    %v115 = vld [vmem:[#allocation2 + $0x208] sm:$0xff]
    %v116 = vld [vmem:[#allocation2 + $0x210] sm:$0xff]
    %v117 = vld [vmem:[#allocation2 + $0x218] sm:$0xff]
    %v118 = vld [vmem:[#allocation2 + $0x220] sm:$0xff]
    %v119 = vld [vmem:[#allocation2 + $0x228] sm:$0xff]
    %v120 = vld [vmem:[#allocation2 + $0x230] sm:$0xff]
    %v121 = vld [vmem:[#allocation2 + $0x238] sm:$0xff]
    %v122 = vld [vmem:[#allocation2 + $0x240] sm:$0xff]
    %v123 = vld [vmem:[#allocation2 + $0x248] sm:$0xff]
    %v124 = vld [vmem:[#allocation2 + $0x250] sm:$0xff]
    %v125 = vld [vmem:[#allocation2 + $0x258] sm:$0xff]
    %v126 = vld [vmem:[#allocation2 + $0x260] sm:$0xff]
    %v127 = vld [vmem:[#allocation2 + $0x268] sm:$0xff]
    %v128 = vld [vmem:[#allocation2 + $0x270] sm:$0xff]
    %v129 = vld [vmem:[#allocation2 + $0x278] sm:$0xff]
    %v130 = vld [vmem:[#allocation2 + $0x280] sm:$0xff]
    %v131 = vld [vmem:[#allocation2 + $0x288] sm:$0xff]
    %v132 = vld [vmem:[#allocation2 + $0x290] sm:$0xff]
    %v133 = vld [vmem:[#allocation2 + $0x298] sm:$0xff]
    %v134 = vld [vmem:[#allocation2 + $0x2a0] sm:$0xff]
    %v135 = vld [vmem:[#allocation2 + $0x2a8] sm:$0xff]
    %v136 = vld [vmem:[#allocation2 + $0x2b0] sm:$0xff]
    %v137 = vld [vmem:[#allocation2 + $0x2b8] sm:$0xff]
    %v138 = vld [vmem:[#allocation2 + $0x2c0] sm:$0xff]
    %v139 = vld [vmem:[#allocation2 + $0x2c8] sm:$0xff]
    %v140 = vld [vmem:[#allocation2 + $0x2d0] sm:$0xff]
    %v141 = vld [vmem:[#allocation2 + $0x2d8] sm:$0xff]
    %v142 = vld [vmem:[#allocation2 + $0x2e0] sm:$0xff]
    %v143 = vld [vmem:[#allocation2 + $0x2e8] sm:$0xff]
    %v144 = vld [vmem:[#allocation2 + $0x2f0] sm:$0xff]
    %v145 = vld [vmem:[#allocation2 + $0x2f8] sm:$0xff]
    %v146 = vld [vmem:[#allocation2 + $0x300] sm:$0xff]
    %v147 = vld [vmem:[#allocation2 + $0x308] sm:$0xff]
    %v148 = vld [vmem:[#allocation2 + $0x310] sm:$0xff]
    %v149 = vld [vmem:[#allocation2 + $0x318] sm:$0xff]
    %v150 = vld [vmem:[#allocation2 + $0x320] sm:$0xff]
    %v151 = vld [vmem:[#allocation2 + $0x328] sm:$0xff]
    %v152 = vld [vmem:[#allocation2 + $0x330] sm:$0xff]
    %v153 = vld [vmem:[#allocation2 + $0x338] sm:$0xff]
    %v154 = vld [vmem:[#allocation2 + $0x340] sm:$0xff]
    %v155 = vld [vmem:[#allocation2 + $0x348] sm:$0xff]
    %v156 = vld [vmem:[#allocation2 + $0x350] sm:$0xff]
    %v157 = vld [vmem:[#allocation2 + $0x358] sm:$0xff]
    %v158 = vld [vmem:[#allocation2 + $0x360] sm:$0xff]
    %v159 = vld [vmem:[#allocation2 + $0x368] sm:$0xff]
    %v160 = vld [vmem:[#allocation2 + $0x370] sm:$0xff]
    %v161 = vld [vmem:[#allocation2 + $0x378] sm:$0xff]
    %v162 = vld [vmem:[#allocation2 + $0x380] sm:$0xff]
    %v163 = vld [vmem:[#allocation2 + $0x388] sm:$0xff]
    %v164 = vld [vmem:[#allocation2 + $0x390] sm:$0xff]
    %v165 = vld [vmem:[#allocation2 + $0x398] sm:$0xff]
    %v166 = vld [vmem:[#allocation2 + $0x3a0] sm:$0xff]
    %v167 = vld [vmem:[#allocation2 + $0x3a8] sm:$0xff]
    %v168 = vld [vmem:[#allocation2 + $0x3b0] sm:$0xff]
    %v169 = vld [vmem:[#allocation2 + $0x3b8] sm:$0xff]
    %v170 = vld [vmem:[#allocation2 + $0x3c0] sm:$0xff]
    %v171 = vld [vmem:[#allocation2 + $0x3c8] sm:$0xff]
    %v172 = vld [vmem:[#allocation2 + $0x3d0] sm:$0xff]
    %v173 = vld [vmem:[#allocation2 + $0x3d8] sm:$0xff]
    %v174 = vld [vmem:[#allocation2 + $0x3e0] sm:$0xff]
    %v175 = vld [vmem:[#allocation2 + $0x3e8] sm:$0xff]
    %v176 = vld [vmem:[#allocation2 + $0x3f0] sm:$0xff]
    %v177 = vld [vmem:[#allocation2 + $0x3f8] sm:$0xff]
    %v178 = vld [vmem:[%s2] sm:$0xff]
    %v180 = vlaneseq
    %v181 = vshrl.u32 %v180, 7
    %v182 = vsub.s32 0, %v181
    %v183 = vrot.slane %v178, %v182
    %v184 = vlaneseq
    %v185 = vshrl.u32 %v184, 7
    %v186 = vsub.s32 1, %v185
    %v187 = vrot.slane %v178, %v186
    %v188 = vlaneseq
    %v189 = vshrl.u32 %v188, 7
    %v190 = vsub.s32 2, %v189
    %v191 = vrot.slane %v178, %v190
    %v192 = vlaneseq
    %v193 = vshrl.u32 %v192, 7
    %v194 = vsub.s32 3, %v193
    %v195 = vrot.slane %v178, %v194
    %v196 = vlaneseq
    %v197 = vshrl.u32 %v196, 7
    %v198 = vsub.s32 4, %v197
    %v199 = vrot.slane %v178, %v198
    %v200 = vlaneseq
    %v201 = vshrl.u32 %v200, 7
    %v202 = vsub.s32 5, %v201
    %v203 = vrot.slane %v178, %v202
    %v204 = vlaneseq
    %v205 = vshrl.u32 %v204, 7
    %v206 = vsub.s32 6, %v205
    %v207 = vrot.slane %v178, %v206
    %v208 = vlaneseq
    %v209 = vshrl.u32 %v208, 7
    %v210 = vsub.s32 7, %v209
    %v211 = vrot.slane %v178, %v210
    %v222 = vunpack.c.l.b16 %v48
    %v223 = vunpack.c.h.b16 %v48
    %v224 = vunpack.c.l.b16 %v49
    %v225 = vunpack.c.h.b16 %v49
    %v226 = vpack.c.b16 %v224, %v222
    %v227 = vpack.c.b16 %v225, %v223
    %v358 = vunpack.c.l.b16 %v50
    %v359 = vunpack.c.h.b16 %v50
    %v360 = vunpack.c.l.b16 %v51
    %v361 = vunpack.c.h.b16 %v51
    %v362 = vunpack.c.l.b16 %v52
    %v363 = vunpack.c.h.b16 %v52
    %v364 = vunpack.c.l.b16 %v53
    %v365 = vunpack.c.h.b16 %v53
    %v366 = vunpack.c.l.b16 %v54
    %v367 = vunpack.c.h.b16 %v54
    %v368 = vunpack.c.l.b16 %v55
    %v369 = vunpack.c.h.b16 %v55
    %v370 = vunpack.c.l.b16 %v56
    %v371 = vunpack.c.h.b16 %v56
    %v372 = vunpack.c.l.b16 %v57
    %v373 = vunpack.c.h.b16 %v57
    %v374 = vunpack.c.l.b16 %v58
    %v375 = vunpack.c.h.b16 %v58
    %v376 = vunpack.c.l.b16 %v59
    %v377 = vunpack.c.h.b16 %v59
    %v378 = vunpack.c.l.b16 %v60
    %v379 = vunpack.c.h.b16 %v60
    %v380 = vunpack.c.l.b16 %v61
    %v381 = vunpack.c.h.b16 %v61
    %v382 = vunpack.c.l.b16 %v62
    %v383 = vunpack.c.h.b16 %v62
    %v384 = vunpack.c.l.b16 %v63
    %v385 = vunpack.c.h.b16 %v63
    %v386 = vunpack.c.l.b16 %v64
    %v387 = vunpack.c.h.b16 %v64
    %v388 = vunpack.c.l.b16 %v65
    %v389 = vunpack.c.h.b16 %v65
    %v390 = vunpack.c.l.b16 %v66
    %v391 = vunpack.c.h.b16 %v66
    %v392 = vunpack.c.l.b16 %v67
    %v393 = vunpack.c.h.b16 %v67
    %v394 = vunpack.c.l.b16 %v68
    %v395 = vunpack.c.h.b16 %v68
    %v396 = vunpack.c.l.b16 %v69
    %v397 = vunpack.c.h.b16 %v69
    %v398 = vunpack.c.l.b16 %v70
    %v399 = vunpack.c.h.b16 %v70
    %v400 = vunpack.c.l.b16 %v71
    %v401 = vunpack.c.h.b16 %v71
    %v402 = vunpack.c.l.b16 %v72
    %v403 = vunpack.c.h.b16 %v72
    %v404 = vunpack.c.l.b16 %v73
    %v405 = vunpack.c.h.b16 %v73
    %v406 = vunpack.c.l.b16 %v74
    %v407 = vunpack.c.h.b16 %v74
    %v408 = vunpack.c.l.b16 %v75
    %v409 = vunpack.c.h.b16 %v75
    %v410 = vunpack.c.l.b16 %v76
    %v411 = vunpack.c.h.b16 %v76
    %v412 = vunpack.c.l.b16 %v77
    %v413 = vunpack.c.h.b16 %v77
    %v414 = vunpack.c.l.b16 %v78
    %v415 = vunpack.c.h.b16 %v78
    %v416 = vunpack.c.l.b16 %v79
    %v417 = vunpack.c.h.b16 %v79
    %v418 = vunpack.c.l.b16 %v80
    %v419 = vunpack.c.h.b16 %v80
    %v420 = vunpack.c.l.b16 %v81
    %v421 = vunpack.c.h.b16 %v81
    %v422 = vunpack.c.l.b16 %v82
    %v423 = vunpack.c.h.b16 %v82
    %v424 = vunpack.c.l.b16 %v83
    %v425 = vunpack.c.h.b16 %v83
    %v426 = vunpack.c.l.b16 %v84
    %v427 = vunpack.c.h.b16 %v84
    %v428 = vunpack.c.l.b16 %v85
    %v429 = vunpack.c.h.b16 %v85
    %v430 = vunpack.c.l.b16 %v86
    %v431 = vunpack.c.h.b16 %v86
    %v432 = vunpack.c.l.b16 %v87
    %v433 = vunpack.c.h.b16 %v87
    %v434 = vunpack.c.l.b16 %v88
    %v435 = vunpack.c.h.b16 %v88
    %v436 = vunpack.c.l.b16 %v89
    %v437 = vunpack.c.h.b16 %v89
    %v438 = vunpack.c.l.b16 %v90
    %v439 = vunpack.c.h.b16 %v90
    %v440 = vunpack.c.l.b16 %v91
    %v441 = vunpack.c.h.b16 %v91
    %v442 = vunpack.c.l.b16 %v92
    %v443 = vunpack.c.h.b16 %v92
    %v444 = vunpack.c.l.b16 %v93
    %v445 = vunpack.c.h.b16 %v93
    %v446 = vunpack.c.l.b16 %v94
    %v447 = vunpack.c.h.b16 %v94
    %v448 = vunpack.c.l.b16 %v95
    %v449 = vunpack.c.h.b16 %v95
    %v450 = vunpack.c.l.b16 %v96
    %v451 = vunpack.c.h.b16 %v96
    %v452 = vunpack.c.l.b16 %v97
    %v453 = vunpack.c.h.b16 %v97
    %v454 = vunpack.c.l.b16 %v98
    %v455 = vunpack.c.h.b16 %v98
    %v456 = vunpack.c.l.b16 %v99
    %v457 = vunpack.c.h.b16 %v99
    %v458 = vunpack.c.l.b16 %v100
    %v459 = vunpack.c.h.b16 %v100
    %v460 = vunpack.c.l.b16 %v101
    %v461 = vunpack.c.h.b16 %v101
    %v462 = vunpack.c.l.b16 %v102
    %v463 = vunpack.c.h.b16 %v102
    %v464 = vunpack.c.l.b16 %v103
    %v465 = vunpack.c.h.b16 %v103
    %v466 = vunpack.c.l.b16 %v104
    %v467 = vunpack.c.h.b16 %v104
    %v468 = vunpack.c.l.b16 %v105
    %v469 = vunpack.c.h.b16 %v105
    %v470 = vunpack.c.l.b16 %v106
    %v471 = vunpack.c.h.b16 %v106
    %v472 = vunpack.c.l.b16 %v107
    %v473 = vunpack.c.h.b16 %v107
    %v474 = vunpack.c.l.b16 %v108
    %v475 = vunpack.c.h.b16 %v108
    %v476 = vunpack.c.l.b16 %v109
    %v477 = vunpack.c.h.b16 %v109
    %v478 = vunpack.c.l.b16 %v110
    %v479 = vunpack.c.h.b16 %v110
    %v480 = vunpack.c.l.b16 %v111
    %v481 = vunpack.c.h.b16 %v111
    %v482 = vunpack.c.l.b16 %v112
    %v483 = vunpack.c.h.b16 %v112
    %v484 = vunpack.c.l.b16 %v113
    %v485 = vunpack.c.h.b16 %v113
    %v486 = vunpack.c.l.b16 %v114
    %v487 = vunpack.c.h.b16 %v114
    %v488 = vunpack.c.l.b16 %v115
    %v489 = vunpack.c.h.b16 %v115
    %v490 = vunpack.c.l.b16 %v116
    %v491 = vunpack.c.h.b16 %v116
    %v492 = vunpack.c.l.b16 %v117
    %v493 = vunpack.c.h.b16 %v117
    %v494 = vunpack.c.l.b16 %v118
    %v495 = vunpack.c.h.b16 %v118
    %v496 = vunpack.c.l.b16 %v119
    %v497 = vunpack.c.h.b16 %v119
    %v498 = vunpack.c.l.b16 %v120
    %v499 = vunpack.c.h.b16 %v120
    %v500 = vunpack.c.l.b16 %v121
    %v501 = vunpack.c.h.b16 %v121
    %v502 = vunpack.c.l.b16 %v122
    %v503 = vunpack.c.h.b16 %v122
    %v504 = vunpack.c.l.b16 %v123
    %v505 = vunpack.c.h.b16 %v123
    %v506 = vunpack.c.l.b16 %v124
    %v507 = vunpack.c.h.b16 %v124
    %v508 = vunpack.c.l.b16 %v125
    %v509 = vunpack.c.h.b16 %v125
    %v510 = vunpack.c.l.b16 %v126
    %v511 = vunpack.c.h.b16 %v126
    %v512 = vunpack.c.l.b16 %v127
    %v513 = vunpack.c.h.b16 %v127
    %v514 = vunpack.c.l.b16 %v128
    %v515 = vunpack.c.h.b16 %v128
    %v516 = vunpack.c.l.b16 %v129
    %v517 = vunpack.c.h.b16 %v129
    %v518 = vunpack.c.l.b16 %v130
    %v519 = vunpack.c.h.b16 %v130
    %v520 = vunpack.c.l.b16 %v131
    %v521 = vunpack.c.h.b16 %v131
    %v522 = vunpack.c.l.b16 %v132
    %v523 = vunpack.c.h.b16 %v132
    %v524 = vunpack.c.l.b16 %v133
    %v525 = vunpack.c.h.b16 %v133
    %v526 = vunpack.c.l.b16 %v134
    %v527 = vunpack.c.h.b16 %v134
    %v528 = vunpack.c.l.b16 %v135
    %v529 = vunpack.c.h.b16 %v135
    %v530 = vunpack.c.l.b16 %v136
    %v531 = vunpack.c.h.b16 %v136
    %v532 = vunpack.c.l.b16 %v137
    %v533 = vunpack.c.h.b16 %v137
    %v534 = vunpack.c.l.b16 %v138
    %v535 = vunpack.c.h.b16 %v138
    %v536 = vunpack.c.l.b16 %v139
    %v537 = vunpack.c.h.b16 %v139
    %v538 = vunpack.c.l.b16 %v140
    %v539 = vunpack.c.h.b16 %v140
    %v540 = vunpack.c.l.b16 %v141
    %v541 = vunpack.c.h.b16 %v141
    %v542 = vunpack.c.l.b16 %v142
    %v543 = vunpack.c.h.b16 %v142
    %v544 = vunpack.c.l.b16 %v143
    %v545 = vunpack.c.h.b16 %v143
    %v546 = vunpack.c.l.b16 %v144
    %v547 = vunpack.c.h.b16 %v144
    %v548 = vunpack.c.l.b16 %v145
    %v549 = vunpack.c.h.b16 %v145
    %v550 = vunpack.c.l.b16 %v146
    %v551 = vunpack.c.h.b16 %v146
    %v552 = vunpack.c.l.b16 %v147
    %v553 = vunpack.c.h.b16 %v147
    %v554 = vunpack.c.l.b16 %v148
    %v555 = vunpack.c.h.b16 %v148
    %v556 = vunpack.c.l.b16 %v149
    %v557 = vunpack.c.h.b16 %v149
    %v558 = vunpack.c.l.b16 %v150
    %v559 = vunpack.c.h.b16 %v150
    %v560 = vunpack.c.l.b16 %v151
    %v561 = vunpack.c.h.b16 %v151
    %v562 = vunpack.c.l.b16 %v152
    %v563 = vunpack.c.h.b16 %v152
    %v564 = vunpack.c.l.b16 %v153
    %v565 = vunpack.c.h.b16 %v153
    %v566 = vunpack.c.l.b16 %v154
    %v567 = vunpack.c.h.b16 %v154
    %v568 = vunpack.c.l.b16 %v155
    %v569 = vunpack.c.h.b16 %v155
    %v570 = vunpack.c.l.b16 %v156
    %v571 = vunpack.c.h.b16 %v156
    %v572 = vunpack.c.l.b16 %v157
    %v573 = vunpack.c.h.b16 %v157
    %v574 = vunpack.c.l.b16 %v158
    %v575 = vunpack.c.h.b16 %v158
    %v576 = vunpack.c.l.b16 %v159
    %v577 = vunpack.c.h.b16 %v159
    %v578 = vunpack.c.l.b16 %v160
    %v579 = vunpack.c.h.b16 %v160
    %v580 = vunpack.c.l.b16 %v161
    %v581 = vunpack.c.h.b16 %v161
    %v582 = vunpack.c.l.b16 %v162
    %v583 = vunpack.c.h.b16 %v162
    %v584 = vunpack.c.l.b16 %v163
    %v585 = vunpack.c.h.b16 %v163
    %v586 = vunpack.c.l.b16 %v164
    %v587 = vunpack.c.h.b16 %v164
    %v588 = vunpack.c.l.b16 %v165
    %v589 = vunpack.c.h.b16 %v165
    %v590 = vunpack.c.l.b16 %v166
    %v591 = vunpack.c.h.b16 %v166
    %v592 = vunpack.c.l.b16 %v167
    %v593 = vunpack.c.h.b16 %v167
    %v594 = vunpack.c.l.b16 %v168
    %v595 = vunpack.c.h.b16 %v168
    %v596 = vunpack.c.l.b16 %v169
    %v597 = vunpack.c.h.b16 %v169
    %v598 = vunpack.c.l.b16 %v170
    %v599 = vunpack.c.h.b16 %v170
    %v600 = vunpack.c.l.b16 %v171
    %v601 = vunpack.c.h.b16 %v171
    %v602 = vunpack.c.l.b16 %v172
    %v603 = vunpack.c.h.b16 %v172
    %v604 = vunpack.c.l.b16 %v173
    %v605 = vunpack.c.h.b16 %v173
    %v606 = vunpack.c.l.b16 %v174
    %v607 = vunpack.c.h.b16 %v174
    %v608 = vunpack.c.l.b16 %v175
    %v609 = vunpack.c.h.b16 %v175
    %v610 = vunpack.c.l.b16 %v176
    %v611 = vunpack.c.h.b16 %v176
    %v612 = vunpack.c.l.b16 %v177
    %v613 = vunpack.c.h.b16 %v177
    %v614 = vpack.c.b16 %v366, %v358
    %v615 = vpack.c.b16 %v367, %v359
    %v616 = vpack.c.b16 %v368, %v360
    %v617 = vpack.c.b16 %v369, %v361
    %v618 = vpack.c.b16 %v370, %v362
    %v619 = vpack.c.b16 %v371, %v363
    %v620 = vpack.c.b16 %v372, %v364
    %v621 = vpack.c.b16 %v373, %v365
    %v622 = vpack.c.b16 %v382, %v374
    %v623 = vpack.c.b16 %v383, %v375
    %v624 = vpack.c.b16 %v384, %v376
    %v625 = vpack.c.b16 %v385, %v377
    %v626 = vpack.c.b16 %v386, %v378
    %v627 = vpack.c.b16 %v387, %v379
    %v628 = vpack.c.b16 %v388, %v380
    %v629 = vpack.c.b16 %v389, %v381
    %v630 = vpack.c.b16 %v398, %v390
    %v631 = vpack.c.b16 %v399, %v391
    %v632 = vpack.c.b16 %v400, %v392
    %v633 = vpack.c.b16 %v401, %v393
    %v634 = vpack.c.b16 %v402, %v394
    %v635 = vpack.c.b16 %v403, %v395
    %v636 = vpack.c.b16 %v404, %v396
    %v637 = vpack.c.b16 %v405, %v397
    %v638 = vpack.c.b16 %v414, %v406
    %v639 = vpack.c.b16 %v415, %v407
    %v640 = vpack.c.b16 %v416, %v408
    %v641 = vpack.c.b16 %v417, %v409
    %v642 = vpack.c.b16 %v418, %v410
    %v643 = vpack.c.b16 %v419, %v411
    %v644 = vpack.c.b16 %v420, %v412
    %v645 = vpack.c.b16 %v421, %v413
    %v646 = vpack.c.b16 %v430, %v422
    %v647 = vpack.c.b16 %v431, %v423
    %v648 = vpack.c.b16 %v432, %v424
    %v649 = vpack.c.b16 %v433, %v425
    %v650 = vpack.c.b16 %v434, %v426
    %v651 = vpack.c.b16 %v435, %v427
    %v652 = vpack.c.b16 %v436, %v428
    %v653 = vpack.c.b16 %v437, %v429
    %v654 = vpack.c.b16 %v446, %v438
    %v655 = vpack.c.b16 %v447, %v439
    %v656 = vpack.c.b16 %v448, %v440
    %v657 = vpack.c.b16 %v449, %v441
    %v658 = vpack.c.b16 %v450, %v442
    %v659 = vpack.c.b16 %v451, %v443
    %v660 = vpack.c.b16 %v452, %v444
    %v661 = vpack.c.b16 %v453, %v445
    %v662 = vpack.c.b16 %v462, %v454
    %v663 = vpack.c.b16 %v463, %v455
    %v664 = vpack.c.b16 %v464, %v456
    %v665 = vpack.c.b16 %v465, %v457
    %v666 = vpack.c.b16 %v466, %v458
    %v667 = vpack.c.b16 %v467, %v459
    %v668 = vpack.c.b16 %v468, %v460
    %v669 = vpack.c.b16 %v469, %v461
    %v670 = vpack.c.b16 %v478, %v470
    %v671 = vpack.c.b16 %v479, %v471
    %v672 = vpack.c.b16 %v480, %v472
    %v673 = vpack.c.b16 %v481, %v473
    %v674 = vpack.c.b16 %v482, %v474
    %v675 = vpack.c.b16 %v483, %v475
    %v676 = vpack.c.b16 %v484, %v476
    %v677 = vpack.c.b16 %v485, %v477
    %v678 = vpack.c.b16 %v494, %v486
    %v679 = vpack.c.b16 %v495, %v487
    %v680 = vpack.c.b16 %v496, %v488
    %v681 = vpack.c.b16 %v497, %v489
    %v682 = vpack.c.b16 %v498, %v490
    %v683 = vpack.c.b16 %v499, %v491
    %v684 = vpack.c.b16 %v500, %v492
    %v685 = vpack.c.b16 %v501, %v493
    %v686 = vpack.c.b16 %v510, %v502
    %v687 = vpack.c.b16 %v511, %v503
    %v688 = vpack.c.b16 %v512, %v504
    %v689 = vpack.c.b16 %v513, %v505
    %v690 = vpack.c.b16 %v514, %v506
    %v691 = vpack.c.b16 %v515, %v507
    %v692 = vpack.c.b16 %v516, %v508
    %v693 = vpack.c.b16 %v517, %v509
    %v694 = vpack.c.b16 %v526, %v518
    %v695 = vpack.c.b16 %v527, %v519
    %v696 = vpack.c.b16 %v528, %v520
    %v697 = vpack.c.b16 %v529, %v521
    %v698 = vpack.c.b16 %v530, %v522
    %v699 = vpack.c.b16 %v531, %v523
    %v700 = vpack.c.b16 %v532, %v524
    %v701 = vpack.c.b16 %v533, %v525
    %v702 = vpack.c.b16 %v542, %v534
    %v703 = vpack.c.b16 %v543, %v535
    %v704 = vpack.c.b16 %v544, %v536
    %v705 = vpack.c.b16 %v545, %v537
    %v706 = vpack.c.b16 %v546, %v538
    %v707 = vpack.c.b16 %v547, %v539
    %v708 = vpack.c.b16 %v548, %v540
    %v709 = vpack.c.b16 %v549, %v541
    %v710 = vpack.c.b16 %v558, %v550
    %v711 = vpack.c.b16 %v559, %v551
    %v712 = vpack.c.b16 %v560, %v552
    %v713 = vpack.c.b16 %v561, %v553
    %v714 = vpack.c.b16 %v562, %v554
    %v715 = vpack.c.b16 %v563, %v555
    %v716 = vpack.c.b16 %v564, %v556
    %v717 = vpack.c.b16 %v565, %v557
    %v718 = vpack.c.b16 %v574, %v566
    %v719 = vpack.c.b16 %v575, %v567
    %v720 = vpack.c.b16 %v576, %v568
    %v721 = vpack.c.b16 %v577, %v569
    %v722 = vpack.c.b16 %v578, %v570
    %v723 = vpack.c.b16 %v579, %v571
    %v724 = vpack.c.b16 %v580, %v572
    %v725 = vpack.c.b16 %v581, %v573
    %v726 = vpack.c.b16 %v590, %v582
    %v727 = vpack.c.b16 %v591, %v583
    %v728 = vpack.c.b16 %v592, %v584
    %v729 = vpack.c.b16 %v593, %v585
    %v730 = vpack.c.b16 %v594, %v586
    %v731 = vpack.c.b16 %v595, %v587
    %v732 = vpack.c.b16 %v596, %v588
    %v733 = vpack.c.b16 %v597, %v589
    %v734 = vpack.c.b16 %v606, %v598
    %v735 = vpack.c.b16 %v607, %v599
    %v736 = vpack.c.b16 %v608, %v600
    %v737 = vpack.c.b16 %v609, %v601
    %v738 = vpack.c.b16 %v610, %v602
    %v739 = vpack.c.b16 %v611, %v603
    %v740 = vpack.c.b16 %v612, %v604
    %v741 = vpack.c.b16 %v613, %v605
    %870 = vmatprep.subr.bf16.mxu0 %v615
    %871 = vmatpush1.bf16.msra.mxu0 %v614
    %872 = vmatprep.subr.bf16.mxu0 %v623
    %873 = vmatpush1.bf16.msra.mxu0 %v622
    %874 = vmatprep.subr.bf16.mxu0 %v631
    %875 = vmatpush1.bf16.msra.mxu0 %v630
    %876 = vmatprep.subr.bf16.mxu0 %v639
    %877 = vmatpush1.bf16.msra.mxu0 %v638
    %878 = vmatprep.subr.bf16.mxu0 %v647
    %879 = vmatpush1.bf16.msra.mxu0 %v646
    %880 = vmatprep.subr.bf16.mxu0 %v655
    %881 = vmatpush1.bf16.msra.mxu0 %v654
    %882 = vmatprep.subr.bf16.mxu0 %v663
    %883 = vmatpush1.bf16.msra.mxu0 %v662
    %884 = vmatprep.subr.bf16.mxu0 %v671
    %885 = vmatpush1.bf16.msra.mxu0 %v670
    %886 = vmatprep.subr.bf16.mxu0 %v679
    %887 = vmatpush1.bf16.msra.mxu0 %v678
    %888 = vmatprep.subr.bf16.mxu0 %v687
    %889 = vmatpush1.bf16.msra.mxu0 %v686
    %890 = vmatprep.subr.bf16.mxu0 %v695
    %891 = vmatpush1.bf16.msra.mxu0 %v694
    %892 = vmatprep.subr.bf16.mxu0 %v703
    %893 = vmatpush1.bf16.msra.mxu0 %v702
    %894 = vmatprep.subr.bf16.mxu0 %v711
    %895 = vmatpush1.bf16.msra.mxu0 %v710
    %896 = vmatprep.subr.bf16.mxu0 %v719
    %897 = vmatpush1.bf16.msra.mxu0 %v718
    %898 = vmatprep.subr.bf16.mxu0 %v727
    %899 = vmatpush1.bf16.msra.mxu0 %v726
    %900 = vmatprep.subr.bf16.mxu0 %v735
    %901 = vmatpush1.bf16.msra.mxu0 %v734
    %902 = vmatprep.mubr.bf16.mxu0 %v227
    %903 = vmatmul.mubr.bf16.gmra.mrb[0].mxu0 %v226
    %v904 = vpop.f32.mrb[0].mxu0
    %v905 = vadd.f32 %v183, %v904
    %v906 = vpop.f32.mrb[0].mxu0
    %v907 = vadd.f32 %v187, %v906
    %v908 = vpop.f32.mrb[0].mxu0
    %v909 = vadd.f32 %v183, %v908
    %v910 = vpop.f32.mrb[0].mxu0
    %v911 = vadd.f32 %v187, %v910
    %912 = vdwg.mxu0
    %913 = vmatprep.subr.bf16.mxu0 %v617
    %914 = vmatpush1.bf16.msra.mxu0 %v616
    %915 = vmatprep.subr.bf16.mxu0 %v625
    %916 = vmatpush1.bf16.msra.mxu0 %v624
    %917 = vmatprep.subr.bf16.mxu0 %v633
    %918 = vmatpush1.bf16.msra.mxu0 %v632
    %919 = vmatprep.subr.bf16.mxu0 %v641
    %920 = vmatpush1.bf16.msra.mxu0 %v640
    %921 = vmatprep.subr.bf16.mxu0 %v649
    %922 = vmatpush1.bf16.msra.mxu0 %v648
    %923 = vmatprep.subr.bf16.mxu0 %v657
    %924 = vmatpush1.bf16.msra.mxu0 %v656
    %925 = vmatprep.subr.bf16.mxu0 %v665
    %926 = vmatpush1.bf16.msra.mxu0 %v664
    %927 = vmatprep.subr.bf16.mxu0 %v673
    %928 = vmatpush1.bf16.msra.mxu0 %v672
    %929 = vmatprep.subr.bf16.mxu0 %v681
    %930 = vmatpush1.bf16.msra.mxu0 %v680
    %931 = vmatprep.subr.bf16.mxu0 %v689
    %932 = vmatpush1.bf16.msra.mxu0 %v688
    %933 = vmatprep.subr.bf16.mxu0 %v697
    %934 = vmatpush1.bf16.msra.mxu0 %v696
    %935 = vmatprep.subr.bf16.mxu0 %v705
    %936 = vmatpush1.bf16.msra.mxu0 %v704
    %937 = vmatprep.subr.bf16.mxu0 %v713
    %938 = vmatpush1.bf16.msra.mxu0 %v712
    %939 = vmatprep.subr.bf16.mxu0 %v721
    %940 = vmatpush1.bf16.msra.mxu0 %v720
    %941 = vmatprep.subr.bf16.mxu0 %v729
    %942 = vmatpush1.bf16.msra.mxu0 %v728
    %943 = vmatprep.subr.bf16.mxu0 %v737
    %944 = vmatpush1.bf16.msra.mxu0 %v736
    %945 = vmatprep.mubr.bf16.mxu0 %v227
    %946 = vmatmul.mubr.bf16.gmra.mrb[0].mxu0 %v226
    %v947 = vpop.f32.mrb[0].mxu0
    %v948 = vadd.f32 %v191, %v947
    %v949 = vpop.f32.mrb[0].mxu0
    %v950 = vadd.f32 %v195, %v949
    %v951 = vpop.f32.mrb[0].mxu0
    %v952 = vadd.f32 %v191, %v951
    %v953 = vpop.f32.mrb[0].mxu0
    %v954 = vadd.f32 %v195, %v953
    %955 = vdwg.mxu0
    %956 = vmatprep.subr.bf16.mxu0 %v619
    %957 = vmatpush1.bf16.msra.mxu0 %v618
    %958 = vmatprep.subr.bf16.mxu0 %v627
    %959 = vmatpush1.bf16.msra.mxu0 %v626
    %960 = vmatprep.subr.bf16.mxu0 %v635
    %961 = vmatpush1.bf16.msra.mxu0 %v634
    %962 = vmatprep.subr.bf16.mxu0 %v643
    %963 = vmatpush1.bf16.msra.mxu0 %v642
    %964 = vmatprep.subr.bf16.mxu0 %v651
    %965 = vmatpush1.bf16.msra.mxu0 %v650
    %966 = vmatprep.subr.bf16.mxu0 %v659
    %967 = vmatpush1.bf16.msra.mxu0 %v658
    %968 = vmatprep.subr.bf16.mxu0 %v667
    %969 = vmatpush1.bf16.msra.mxu0 %v666
    %970 = vmatprep.subr.bf16.mxu0 %v675
    %971 = vmatpush1.bf16.msra.mxu0 %v674
    %972 = vmatprep.subr.bf16.mxu0 %v683
    %973 = vmatpush1.bf16.msra.mxu0 %v682
    %974 = vmatprep.subr.bf16.mxu0 %v691
    %975 = vmatpush1.bf16.msra.mxu0 %v690
    %976 = vmatprep.subr.bf16.mxu0 %v699
    %977 = vmatpush1.bf16.msra.mxu0 %v698
    %978 = vmatprep.subr.bf16.mxu0 %v707
    %979 = vmatpush1.bf16.msra.mxu0 %v706
    %980 = vmatprep.subr.bf16.mxu0 %v715
    %981 = vmatpush1.bf16.msra.mxu0 %v714
    %982 = vmatprep.subr.bf16.mxu0 %v723
    %983 = vmatpush1.bf16.msra.mxu0 %v722
    %984 = vmatprep.subr.bf16.mxu0 %v731
    %985 = vmatpush1.bf16.msra.mxu0 %v730
    %986 = vmatprep.subr.bf16.mxu0 %v739
    %987 = vmatpush1.bf16.msra.mxu0 %v738
    %988 = vmatprep.mubr.bf16.mxu0 %v227
    %989 = vmatmul.mubr.bf16.gmra.mrb[0].mxu0 %v226
    %v990 = vpop.f32.mrb[0].mxu0
    %v991 = vadd.f32 %v199, %v990
    %v992 = vpop.f32.mrb[0].mxu0
    %v993 = vadd.f32 %v203, %v992
    %v994 = vpop.f32.mrb[0].mxu0
    %v995 = vadd.f32 %v199, %v994
    %v996 = vpop.f32.mrb[0].mxu0
    %v997 = vadd.f32 %v203, %v996
    %998 = vdwg.mxu0
    %999 = vmatprep.subr.bf16.mxu0 %v621
    %1000 = vmatpush1.bf16.msra.mxu0 %v620
    %1001 = vmatprep.subr.bf16.mxu0 %v629
    %1002 = vmatpush1.bf16.msra.mxu0 %v628
    %1003 = vmatprep.subr.bf16.mxu0 %v637
    %1004 = vmatpush1.bf16.msra.mxu0 %v636
    %1005 = vmatprep.subr.bf16.mxu0 %v645
    %1006 = vmatpush1.bf16.msra.mxu0 %v644
    %1007 = vmatprep.subr.bf16.mxu0 %v653
    %1008 = vmatpush1.bf16.msra.mxu0 %v652
    %1009 = vmatprep.subr.bf16.mxu0 %v661
    %1010 = vmatpush1.bf16.msra.mxu0 %v660
    %1011 = vmatprep.subr.bf16.mxu0 %v669
    %1012 = vmatpush1.bf16.msra.mxu0 %v668
    %1013 = vmatprep.subr.bf16.mxu0 %v677
    %1014 = vmatpush1.bf16.msra.mxu0 %v676
    %1015 = vmatprep.subr.bf16.mxu0 %v685
    %1016 = vmatpush1.bf16.msra.mxu0 %v684
    %1017 = vmatprep.subr.bf16.mxu0 %v693
    %1018 = vmatpush1.bf16.msra.mxu0 %v692
    %1019 = vmatprep.subr.bf16.mxu0 %v701
    %1020 = vmatpush1.bf16.msra.mxu0 %v700
    %1021 = vmatprep.subr.bf16.mxu0 %v709
    %1022 = vmatpush1.bf16.msra.mxu0 %v708
    %1023 = vmatprep.subr.bf16.mxu0 %v717
    %1024 = vmatpush1.bf16.msra.mxu0 %v716
    %1025 = vmatprep.subr.bf16.mxu0 %v725
    %1026 = vmatpush1.bf16.msra.mxu0 %v724
    %1027 = vmatprep.subr.bf16.mxu0 %v733
    %1028 = vmatpush1.bf16.msra.mxu0 %v732
    %1029 = vmatprep.subr.bf16.mxu0 %v741
    %1030 = vmatpush1.bf16.msra.mxu0 %v740
    %1031 = vmatprep.mubr.bf16.mxu0 %v227
    %1032 = vmatmul.mubr.bf16.gmra.mrb[0].mxu0 %v226
    %v1033 = vpop.f32.mrb[0].mxu0
    %v1034 = vadd.f32 %v207, %v1033
    %v1035 = vpop.f32.mrb[0].mxu0
    %v1036 = vadd.f32 %v211, %v1035
    %v1037 = vpop.f32.mrb[0].mxu0
    %v1038 = vadd.f32 %v207, %v1037
    %v1039 = vpop.f32.mrb[0].mxu0
    %v1040 = vadd.f32 %v211, %v1039
    %1041 = vdwg.mxu0
    %v1042 = vmax.f32 %v905, 0.0
    %v1043 = vmax.f32 %v907, 0.0
    %v1044 = vmax.f32 %v948, 0.0
    %v1045 = vmax.f32 %v950, 0.0
    %v1046 = vmax.f32 %v991, 0.0
    %v1047 = vmax.f32 %v993, 0.0
    %v1048 = vmax.f32 %v1034, 0.0
    %v1049 = vmax.f32 %v1036, 0.0
    %v1050 = vmax.f32 %v909, 0.0
    %v1051 = vmax.f32 %v911, 0.0
    %v1052 = vmax.f32 %v952, 0.0
    %v1053 = vmax.f32 %v954, 0.0
    %v1054 = vmax.f32 %v995, 0.0
    %v1055 = vmax.f32 %v997, 0.0
    %v1056 = vmax.f32 %v1038, 0.0
    %v1057 = vmax.f32 %v1040, 0.0
    %v1058 = vld [vmem:[#allocation4] sm:$0xff]
    %v1059 = vld [vmem:[#allocation4 + $0x8] sm:$0xff]
    %v1060 = vld [vmem:[#allocation4 + $0x10] sm:$0xff]
    %v1061 = vld [vmem:[#allocation4 + $0x18] sm:$0xff]
    %v1062 = vld [vmem:[#allocation4 + $0x20] sm:$0xff]
    %v1063 = vld [vmem:[#allocation4 + $0x28] sm:$0xff]
    %v1064 = vld [vmem:[#allocation4 + $0x30] sm:$0xff]
    %v1065 = vld [vmem:[#allocation4 + $0x38] sm:$0xff]
    %v1066 = vld [vmem:[#allocation4 + $0x40] sm:$0xff]
    %v1067 = vld [vmem:[#allocation4 + $0x48] sm:$0xff]
    %v1068 = vld [vmem:[#allocation4 + $0x50] sm:$0xff]
    %v1069 = vld [vmem:[#allocation4 + $0x58] sm:$0xff]
    %v1070 = vld [vmem:[#allocation4 + $0x60] sm:$0xff]
    %v1071 = vld [vmem:[#allocation4 + $0x68] sm:$0xff]
    %v1072 = vld [vmem:[#allocation4 + $0x70] sm:$0xff]
    %v1073 = vld [vmem:[#allocation4 + $0x78] sm:$0xff]
    %v1074 = vld [vmem:[#allocation4 + $0x80] sm:$0xff]
    %v1075 = vld [vmem:[#allocation4 + $0x88] sm:$0xff]
    %v1076 = vld [vmem:[#allocation4 + $0x90] sm:$0xff]
    %v1077 = vld [vmem:[#allocation4 + $0x98] sm:$0xff]
    %v1078 = vld [vmem:[#allocation4 + $0xa0] sm:$0xff]
    %v1079 = vld [vmem:[#allocation4 + $0xa8] sm:$0xff]
    %v1080 = vld [vmem:[#allocation4 + $0xb0] sm:$0xff]
    %v1081 = vld [vmem:[#allocation4 + $0xb8] sm:$0xff]
    %v1082 = vld [vmem:[#allocation4 + $0xc0] sm:$0xff]
    %v1083 = vld [vmem:[#allocation4 + $0xc8] sm:$0xff]
    %v1084 = vld [vmem:[#allocation4 + $0xd0] sm:$0xff]
    %v1085 = vld [vmem:[#allocation4 + $0xd8] sm:$0xff]
    %v1086 = vld [vmem:[#allocation4 + $0xe0] sm:$0xff]
    %v1087 = vld [vmem:[#allocation4 + $0xe8] sm:$0xff]
    %v1088 = vld [vmem:[#allocation4 + $0xf0] sm:$0xff]
    %v1089 = vld [vmem:[#allocation4 + $0xf8] sm:$0xff]
    %v1090 = vld [vmem:[#allocation4 + $0x100] sm:$0xff]
    %v1091 = vld [vmem:[#allocation4 + $0x108] sm:$0xff]
    %v1092 = vld [vmem:[#allocation4 + $0x110] sm:$0xff]
    %v1093 = vld [vmem:[#allocation4 + $0x118] sm:$0xff]
    %v1094 = vld [vmem:[#allocation4 + $0x120] sm:$0xff]
    %v1095 = vld [vmem:[#allocation4 + $0x128] sm:$0xff]
    %v1096 = vld [vmem:[#allocation4 + $0x130] sm:$0xff]
    %v1097 = vld [vmem:[#allocation4 + $0x138] sm:$0xff]
    %v1098 = vld [vmem:[#allocation4 + $0x140] sm:$0xff]
    %v1099 = vld [vmem:[#allocation4 + $0x148] sm:$0xff]
    %v1100 = vld [vmem:[#allocation4 + $0x150] sm:$0xff]
    %v1101 = vld [vmem:[#allocation4 + $0x158] sm:$0xff]
    %v1102 = vld [vmem:[#allocation4 + $0x160] sm:$0xff]
    %v1103 = vld [vmem:[#allocation4 + $0x168] sm:$0xff]
    %v1104 = vld [vmem:[#allocation4 + $0x170] sm:$0xff]
    %v1105 = vld [vmem:[#allocation4 + $0x178] sm:$0xff]
    %v1106 = vld [vmem:[#allocation4 + $0x180] sm:$0xff]
    %v1107 = vld [vmem:[#allocation4 + $0x188] sm:$0xff]
    %v1108 = vld [vmem:[#allocation4 + $0x190] sm:$0xff]
    %v1109 = vld [vmem:[#allocation4 + $0x198] sm:$0xff]
    %v1110 = vld [vmem:[#allocation4 + $0x1a0] sm:$0xff]
    %v1111 = vld [vmem:[#allocation4 + $0x1a8] sm:$0xff]
    %v1112 = vld [vmem:[#allocation4 + $0x1b0] sm:$0xff]
    %v1113 = vld [vmem:[#allocation4 + $0x1b8] sm:$0xff]
    %v1114 = vld [vmem:[#allocation4 + $0x1c0] sm:$0xff]
    %v1115 = vld [vmem:[#allocation4 + $0x1c8] sm:$0xff]
    %v1116 = vld [vmem:[#allocation4 + $0x1d0] sm:$0xff]
    %v1117 = vld [vmem:[#allocation4 + $0x1d8] sm:$0xff]
    %v1118 = vld [vmem:[#allocation4 + $0x1e0] sm:$0xff]
    %v1119 = vld [vmem:[#allocation4 + $0x1e8] sm:$0xff]
    %v1120 = vld [vmem:[#allocation4 + $0x1f0] sm:$0xff]
    %v1121 = vld [vmem:[#allocation4 + $0x1f8] sm:$0xff]
    %v1122 = vld [vmem:[#allocation4 + $0x200] sm:$0xff]
    %v1123 = vld [vmem:[#allocation4 + $0x208] sm:$0xff]
    %v1124 = vld [vmem:[#allocation4 + $0x210] sm:$0xff]
    %v1125 = vld [vmem:[#allocation4 + $0x218] sm:$0xff]
    %v1126 = vld [vmem:[#allocation4 + $0x220] sm:$0xff]
    %v1127 = vld [vmem:[#allocation4 + $0x228] sm:$0xff]
    %v1128 = vld [vmem:[#allocation4 + $0x230] sm:$0xff]
    %v1129 = vld [vmem:[#allocation4 + $0x238] sm:$0xff]
    %v1130 = vld [vmem:[#allocation4 + $0x240] sm:$0xff]
    %v1131 = vld [vmem:[#allocation4 + $0x248] sm:$0xff]
    %v1132 = vld [vmem:[#allocation4 + $0x250] sm:$0xff]
    %v1133 = vld [vmem:[#allocation4 + $0x258] sm:$0xff]
    %v1134 = vld [vmem:[#allocation4 + $0x260] sm:$0xff]
    %v1135 = vld [vmem:[#allocation4 + $0x268] sm:$0xff]
    %v1136 = vld [vmem:[#allocation4 + $0x270] sm:$0xff]
    %v1137 = vld [vmem:[#allocation4 + $0x278] sm:$0xff]
    %v1138 = vld [vmem:[#allocation4 + $0x280] sm:$0xff]
    %v1139 = vld [vmem:[#allocation4 + $0x288] sm:$0xff]
    %v1140 = vld [vmem:[#allocation4 + $0x290] sm:$0xff]
    %v1141 = vld [vmem:[#allocation4 + $0x298] sm:$0xff]
    %v1142 = vld [vmem:[#allocation4 + $0x2a0] sm:$0xff]
    %v1143 = vld [vmem:[#allocation4 + $0x2a8] sm:$0xff]
    %v1144 = vld [vmem:[#allocation4 + $0x2b0] sm:$0xff]
    %v1145 = vld [vmem:[#allocation4 + $0x2b8] sm:$0xff]
    %v1146 = vld [vmem:[#allocation4 + $0x2c0] sm:$0xff]
    %v1147 = vld [vmem:[#allocation4 + $0x2c8] sm:$0xff]
    %v1148 = vld [vmem:[#allocation4 + $0x2d0] sm:$0xff]
    %v1149 = vld [vmem:[#allocation4 + $0x2d8] sm:$0xff]
    %v1150 = vld [vmem:[#allocation4 + $0x2e0] sm:$0xff]
    %v1151 = vld [vmem:[#allocation4 + $0x2e8] sm:$0xff]
    %v1152 = vld [vmem:[#allocation4 + $0x2f0] sm:$0xff]
    %v1153 = vld [vmem:[#allocation4 + $0x2f8] sm:$0xff]
    %v1154 = vld [vmem:[#allocation4 + $0x300] sm:$0xff]
    %v1155 = vld [vmem:[#allocation4 + $0x308] sm:$0xff]
    %v1156 = vld [vmem:[#allocation4 + $0x310] sm:$0xff]
    %v1157 = vld [vmem:[#allocation4 + $0x318] sm:$0xff]
    %v1158 = vld [vmem:[#allocation4 + $0x320] sm:$0xff]
    %v1159 = vld [vmem:[#allocation4 + $0x328] sm:$0xff]
    %v1160 = vld [vmem:[#allocation4 + $0x330] sm:$0xff]
    %v1161 = vld [vmem:[#allocation4 + $0x338] sm:$0xff]
    %v1162 = vld [vmem:[#allocation4 + $0x340] sm:$0xff]
    %v1163 = vld [vmem:[#allocation4 + $0x348] sm:$0xff]
    %v1164 = vld [vmem:[#allocation4 + $0x350] sm:$0xff]
    %v1165 = vld [vmem:[#allocation4 + $0x358] sm:$0xff]
    %v1166 = vld [vmem:[#allocation4 + $0x360] sm:$0xff]
    %v1167 = vld [vmem:[#allocation4 + $0x368] sm:$0xff]
    %v1168 = vld [vmem:[#allocation4 + $0x370] sm:$0xff]
    %v1169 = vld [vmem:[#allocation4 + $0x378] sm:$0xff]
    %v1170 = vld [vmem:[#allocation4 + $0x380] sm:$0xff]
    %v1171 = vld [vmem:[#allocation4 + $0x388] sm:$0xff]
    %v1172 = vld [vmem:[#allocation4 + $0x390] sm:$0xff]
    %v1173 = vld [vmem:[#allocation4 + $0x398] sm:$0xff]
    %v1174 = vld [vmem:[#allocation4 + $0x3a0] sm:$0xff]
    %v1175 = vld [vmem:[#allocation4 + $0x3a8] sm:$0xff]
    %v1176 = vld [vmem:[#allocation4 + $0x3b0] sm:$0xff]
    %v1177 = vld [vmem:[#allocation4 + $0x3b8] sm:$0xff]
    %v1178 = vld [vmem:[#allocation4 + $0x3c0] sm:$0xff]
    %v1179 = vld [vmem:[#allocation4 + $0x3c8] sm:$0xff]
    %v1180 = vld [vmem:[#allocation4 + $0x3d0] sm:$0xff]
    %v1181 = vld [vmem:[#allocation4 + $0x3d8] sm:$0xff]
    %v1182 = vld [vmem:[#allocation4 + $0x3e0] sm:$0xff]
    %v1183 = vld [vmem:[#allocation4 + $0x3e8] sm:$0xff]
    %v1184 = vld [vmem:[#allocation4 + $0x3f0] sm:$0xff]
    %v1185 = vld [vmem:[#allocation4 + $0x3f8] sm:$0xff]
    %v1186 = vld [vmem:[%s4] sm:$0x1]
    %v1188 = vlaneseq
    %v1189 = vshrl.u32 %v1188, 7
    %v1190 = vsub.s32 0, %v1189
    %v1191 = vrot.slane %v1186, %v1190
    %1193 = vmatprep.subr.mxu0 0.0
    %1194 = vmatpush1.msra.mxu0 %v1058
    %1195 = vmatprep.subr.mxu0 0.0
    %1196 = vmatpush1.msra.mxu0 %v1059
    %1197 = vmatprep.subr.mxu0 0.0
    %1198 = vmatpush1.msra.mxu0 %v1060
    %1199 = vmatprep.subr.mxu0 0.0
    %1200 = vmatpush1.msra.mxu0 %v1061
    %1201 = vmatprep.subr.mxu0 0.0
    %1202 = vmatpush1.msra.mxu0 %v1062
    %1203 = vmatprep.subr.mxu0 0.0
    %1204 = vmatpush1.msra.mxu0 %v1063
    %1205 = vmatprep.subr.mxu0 0.0
    %1206 = vmatpush1.msra.mxu0 %v1064
    %1207 = vmatprep.subr.mxu0 0.0
    %1208 = vmatpush1.msra.mxu0 %v1065
    %1209 = vmatprep.subr.mxu0 0.0
    %1210 = vmatpush1.msra.mxu0 %v1066
    %1211 = vmatprep.subr.mxu0 0.0
    %1212 = vmatpush1.msra.mxu0 %v1067
    %1213 = vmatprep.subr.mxu0 0.0
    %1214 = vmatpush1.msra.mxu0 %v1068
    %1215 = vmatprep.subr.mxu0 0.0
    %1216 = vmatpush1.msra.mxu0 %v1069
    %1217 = vmatprep.subr.mxu0 0.0
    %1218 = vmatpush1.msra.mxu0 %v1070
    %1219 = vmatprep.subr.mxu0 0.0
    %1220 = vmatpush1.msra.mxu0 %v1071
    %1221 = vmatprep.subr.mxu0 0.0
    %1222 = vmatpush1.msra.mxu0 %v1072
    %1223 = vmatprep.subr.mxu0 0.0
    %1224 = vmatpush1.msra.mxu0 %v1073
    %1225 = vmatprep.subr.mxu0 0.0
    %1226 = vmatpush1.msra.mxu0 %v1074
    %1227 = vmatprep.subr.mxu0 0.0
    %1228 = vmatpush1.msra.mxu0 %v1075
    %1229 = vmatprep.subr.mxu0 0.0
    %1230 = vmatpush1.msra.mxu0 %v1076
    %1231 = vmatprep.subr.mxu0 0.0
    %1232 = vmatpush1.msra.mxu0 %v1077
    %1233 = vmatprep.subr.mxu0 0.0
    %1234 = vmatpush1.msra.mxu0 %v1078
    %1235 = vmatprep.subr.mxu0 0.0
    %1236 = vmatpush1.msra.mxu0 %v1079
    %1237 = vmatprep.subr.mxu0 0.0
    %1238 = vmatpush1.msra.mxu0 %v1080
    %1239 = vmatprep.subr.mxu0 0.0
    %1240 = vmatpush1.msra.mxu0 %v1081
    %1241 = vmatprep.subr.mxu0 0.0
    %1242 = vmatpush1.msra.mxu0 %v1082
    %1243 = vmatprep.subr.mxu0 0.0
    %1244 = vmatpush1.msra.mxu0 %v1083
    %1245 = vmatprep.subr.mxu0 0.0
    %1246 = vmatpush1.msra.mxu0 %v1084
    %1247 = vmatprep.subr.mxu0 0.0
    %1248 = vmatpush1.msra.mxu0 %v1085
    %1249 = vmatprep.subr.mxu0 0.0
    %1250 = vmatpush1.msra.mxu0 %v1086
    %1251 = vmatprep.subr.mxu0 0.0
    %1252 = vmatpush1.msra.mxu0 %v1087
    %1253 = vmatprep.subr.mxu0 0.0
    %1254 = vmatpush1.msra.mxu0 %v1088
    %1255 = vmatprep.subr.mxu0 0.0
    %1256 = vmatpush1.msra.mxu0 %v1089
    %1257 = vmatprep.mubr.f32.mxu0 %v1043
    %1258 = vmatmul.mubr.f32.gmra.mrb[0].mxu0 %v1042
    %v1259 = vpop.f32.mrb[0].mxu0
    %v1260 = vadd.f32 %v1191, %v1259
    %v1261 = vpop.f32.mrb[0].mxu0
    %1262 = vmatprep.mubr.f32.mxu0 %v1051
    %1263 = vmatmul.mubr.f32.gmra.mrb[0].mxu0 %v1050
    %v1264 = vpop.f32.mrb[0].mxu0
    %v1265 = vadd.f32 %v1191, %v1264
    %v1266 = vpop.f32.mrb[0].mxu0
    %1267 = vdwg.mxu0
    %1268 = vmatprep.subr.mxu0 0.0
    %1269 = vmatpush1.msra.mxu0 %v1090
    %1270 = vmatprep.subr.mxu0 0.0
    %1271 = vmatpush1.msra.mxu0 %v1091
    %1272 = vmatprep.subr.mxu0 0.0
    %1273 = vmatpush1.msra.mxu0 %v1092
    %1274 = vmatprep.subr.mxu0 0.0
    %1275 = vmatpush1.msra.mxu0 %v1093
    %1276 = vmatprep.subr.mxu0 0.0
    %1277 = vmatpush1.msra.mxu0 %v1094
    %1278 = vmatprep.subr.mxu0 0.0
    %1279 = vmatpush1.msra.mxu0 %v1095
    %1280 = vmatprep.subr.mxu0 0.0
    %1281 = vmatpush1.msra.mxu0 %v1096
    %1282 = vmatprep.subr.mxu0 0.0
    %1283 = vmatpush1.msra.mxu0 %v1097
    %1284 = vmatprep.subr.mxu0 0.0
    %1285 = vmatpush1.msra.mxu0 %v1098
    %1286 = vmatprep.subr.mxu0 0.0
    %1287 = vmatpush1.msra.mxu0 %v1099
    %1288 = vmatprep.subr.mxu0 0.0
    %1289 = vmatpush1.msra.mxu0 %v1100
    %1290 = vmatprep.subr.mxu0 0.0
    %1291 = vmatpush1.msra.mxu0 %v1101
    %1292 = vmatprep.subr.mxu0 0.0
    %1293 = vmatpush1.msra.mxu0 %v1102
    %1294 = vmatprep.subr.mxu0 0.0
    %1295 = vmatpush1.msra.mxu0 %v1103
    %1296 = vmatprep.subr.mxu0 0.0
    %1297 = vmatpush1.msra.mxu0 %v1104
    %1298 = vmatprep.subr.mxu0 0.0
    %1299 = vmatpush1.msra.mxu0 %v1105
    %1300 = vmatprep.subr.mxu0 0.0
    %1301 = vmatpush1.msra.mxu0 %v1106
    %1302 = vmatprep.subr.mxu0 0.0
    %1303 = vmatpush1.msra.mxu0 %v1107
    %1304 = vmatprep.subr.mxu0 0.0
    %1305 = vmatpush1.msra.mxu0 %v1108
    %1306 = vmatprep.subr.mxu0 0.0
    %1307 = vmatpush1.msra.mxu0 %v1109
    %1308 = vmatprep.subr.mxu0 0.0
    %1309 = vmatpush1.msra.mxu0 %v1110
    %1310 = vmatprep.subr.mxu0 0.0
    %1311 = vmatpush1.msra.mxu0 %v1111
    %1312 = vmatprep.subr.mxu0 0.0
    %1313 = vmatpush1.msra.mxu0 %v1112
    %1314 = vmatprep.subr.mxu0 0.0
    %1315 = vmatpush1.msra.mxu0 %v1113
    %1316 = vmatprep.subr.mxu0 0.0
    %1317 = vmatpush1.msra.mxu0 %v1114
    %1318 = vmatprep.subr.mxu0 0.0
    %1319 = vmatpush1.msra.mxu0 %v1115
    %1320 = vmatprep.subr.mxu0 0.0
    %1321 = vmatpush1.msra.mxu0 %v1116
    %1322 = vmatprep.subr.mxu0 0.0
    %1323 = vmatpush1.msra.mxu0 %v1117
    %1324 = vmatprep.subr.mxu0 0.0
    %1325 = vmatpush1.msra.mxu0 %v1118
    %1326 = vmatprep.subr.mxu0 0.0
    %1327 = vmatpush1.msra.mxu0 %v1119
    %1328 = vmatprep.subr.mxu0 0.0
    %1329 = vmatpush1.msra.mxu0 %v1120
    %1330 = vmatprep.subr.mxu0 0.0
    %1331 = vmatpush1.msra.mxu0 %v1121
    %1332 = vmatprep.mubr.f32.mxu0 %v1045
    %1333 = vmatmul.mubr.f32.gmra.mrb[0].mxu0 %v1044
    %v1334 = vpop.f32.mrb[0].mxu0
    %v1335 = vadd.f32 %v1260, %v1334
    %v1336 = vpop.f32.mrb[0].mxu0
    %1337 = vmatprep.mubr.f32.mxu0 %v1053
    %1338 = vmatmul.mubr.f32.gmra.mrb[0].mxu0 %v1052
    %v1339 = vpop.f32.mrb[0].mxu0
    %v1340 = vadd.f32 %v1265, %v1339
    %v1341 = vpop.f32.mrb[0].mxu0
    %1342 = vdwg.mxu0
    %1343 = vmatprep.subr.mxu0 0.0
    %1344 = vmatpush1.msra.mxu0 %v1122
    %1345 = vmatprep.subr.mxu0 0.0
    %1346 = vmatpush1.msra.mxu0 %v1123
    %1347 = vmatprep.subr.mxu0 0.0
    %1348 = vmatpush1.msra.mxu0 %v1124
    %1349 = vmatprep.subr.mxu0 0.0
    %1350 = vmatpush1.msra.mxu0 %v1125
    %1351 = vmatprep.subr.mxu0 0.0
    %1352 = vmatpush1.msra.mxu0 %v1126
    %1353 = vmatprep.subr.mxu0 0.0
    %1354 = vmatpush1.msra.mxu0 %v1127
    %1355 = vmatprep.subr.mxu0 0.0
    %1356 = vmatpush1.msra.mxu0 %v1128
    %1357 = vmatprep.subr.mxu0 0.0
    %1358 = vmatpush1.msra.mxu0 %v1129
    %1359 = vmatprep.subr.mxu0 0.0
    %1360 = vmatpush1.msra.mxu0 %v1130
    %1361 = vmatprep.subr.mxu0 0.0
    %1362 = vmatpush1.msra.mxu0 %v1131
    %1363 = vmatprep.subr.mxu0 0.0
    %1364 = vmatpush1.msra.mxu0 %v1132
    %1365 = vmatprep.subr.mxu0 0.0
    %1366 = vmatpush1.msra.mxu0 %v1133
    %1367 = vmatprep.subr.mxu0 0.0
    %1368 = vmatpush1.msra.mxu0 %v1134
    %1369 = vmatprep.subr.mxu0 0.0
    %1370 = vmatpush1.msra.mxu0 %v1135
    %1371 = vmatprep.subr.mxu0 0.0
    %1372 = vmatpush1.msra.mxu0 %v1136
    %1373 = vmatprep.subr.mxu0 0.0
    %1374 = vmatpush1.msra.mxu0 %v1137
    %1375 = vmatprep.subr.mxu0 0.0
    %1376 = vmatpush1.msra.mxu0 %v1138
    %1377 = vmatprep.subr.mxu0 0.0
    %1378 = vmatpush1.msra.mxu0 %v1139
    %1379 = vmatprep.subr.mxu0 0.0
    %1380 = vmatpush1.msra.mxu0 %v1140
    %1381 = vmatprep.subr.mxu0 0.0
    %1382 = vmatpush1.msra.mxu0 %v1141
    %1383 = vmatprep.subr.mxu0 0.0
    %1384 = vmatpush1.msra.mxu0 %v1142
    %1385 = vmatprep.subr.mxu0 0.0
    %1386 = vmatpush1.msra.mxu0 %v1143
    %1387 = vmatprep.subr.mxu0 0.0
    %1388 = vmatpush1.msra.mxu0 %v1144
    %1389 = vmatprep.subr.mxu0 0.0
    %1390 = vmatpush1.msra.mxu0 %v1145
    %1391 = vmatprep.subr.mxu0 0.0
    %1392 = vmatpush1.msra.mxu0 %v1146
    %1393 = vmatprep.subr.mxu0 0.0
    %1394 = vmatpush1.msra.mxu0 %v1147
    %1395 = vmatprep.subr.mxu0 0.0
    %1396 = vmatpush1.msra.mxu0 %v1148
    %1397 = vmatprep.subr.mxu0 0.0
    %1398 = vmatpush1.msra.mxu0 %v1149
    %1399 = vmatprep.subr.mxu0 0.0
    %1400 = vmatpush1.msra.mxu0 %v1150
    %1401 = vmatprep.subr.mxu0 0.0
    %1402 = vmatpush1.msra.mxu0 %v1151
    %1403 = vmatprep.subr.mxu0 0.0
    %1404 = vmatpush1.msra.mxu0 %v1152
    %1405 = vmatprep.subr.mxu0 0.0
    %1406 = vmatpush1.msra.mxu0 %v1153
    %1407 = vmatprep.mubr.f32.mxu0 %v1047
    %1408 = vmatmul.mubr.f32.gmra.mrb[0].mxu0 %v1046
    %v1409 = vpop.f32.mrb[0].mxu0
    %v1410 = vadd.f32 %v1335, %v1409
    %v1411 = vpop.f32.mrb[0].mxu0
    %1412 = vmatprep.mubr.f32.mxu0 %v1055
    %1413 = vmatmul.mubr.f32.gmra.mrb[0].mxu0 %v1054
    %v1414 = vpop.f32.mrb[0].mxu0
    %v1415 = vadd.f32 %v1340, %v1414
    %v1416 = vpop.f32.mrb[0].mxu0
    %1417 = vdwg.mxu0
    %1418 = vmatprep.subr.mxu0 0.0
    %1419 = vmatpush1.msra.mxu0 %v1154
    %1420 = vmatprep.subr.mxu0 0.0
    %1421 = vmatpush1.msra.mxu0 %v1155
    %1422 = vmatprep.subr.mxu0 0.0
    %1423 = vmatpush1.msra.mxu0 %v1156
    %1424 = vmatprep.subr.mxu0 0.0
    %1425 = vmatpush1.msra.mxu0 %v1157
    %1426 = vmatprep.subr.mxu0 0.0
    %1427 = vmatpush1.msra.mxu0 %v1158
    %1428 = vmatprep.subr.mxu0 0.0
    %1429 = vmatpush1.msra.mxu0 %v1159
    %1430 = vmatprep.subr.mxu0 0.0
    %1431 = vmatpush1.msra.mxu0 %v1160
    %1432 = vmatprep.subr.mxu0 0.0
    %1433 = vmatpush1.msra.mxu0 %v1161
    %1434 = vmatprep.subr.mxu0 0.0
    %1435 = vmatpush1.msra.mxu0 %v1162
    %1436 = vmatprep.subr.mxu0 0.0
    %1437 = vmatpush1.msra.mxu0 %v1163
    %1438 = vmatprep.subr.mxu0 0.0
    %1439 = vmatpush1.msra.mxu0 %v1164
    %1440 = vmatprep.subr.mxu0 0.0
    %1441 = vmatpush1.msra.mxu0 %v1165
    %1442 = vmatprep.subr.mxu0 0.0
    %1443 = vmatpush1.msra.mxu0 %v1166
    %1444 = vmatprep.subr.mxu0 0.0
    %1445 = vmatpush1.msra.mxu0 %v1167
    %1446 = vmatprep.subr.mxu0 0.0
    %1447 = vmatpush1.msra.mxu0 %v1168
    %1448 = vmatprep.subr.mxu0 0.0
    %1449 = vmatpush1.msra.mxu0 %v1169
    %1450 = vmatprep.subr.mxu0 0.0
    %1451 = vmatpush1.msra.mxu0 %v1170
    %1452 = vmatprep.subr.mxu0 0.0
    %1453 = vmatpush1.msra.mxu0 %v1171
    %1454 = vmatprep.subr.mxu0 0.0
    %1455 = vmatpush1.msra.mxu0 %v1172
    %1456 = vmatprep.subr.mxu0 0.0
    %1457 = vmatpush1.msra.mxu0 %v1173
    %1458 = vmatprep.subr.mxu0 0.0
    %1459 = vmatpush1.msra.mxu0 %v1174
    %1460 = vmatprep.subr.mxu0 0.0
    %1461 = vmatpush1.msra.mxu0 %v1175
    %1462 = vmatprep.subr.mxu0 0.0
    %1463 = vmatpush1.msra.mxu0 %v1176
    %1464 = vmatprep.subr.mxu0 0.0
    %1465 = vmatpush1.msra.mxu0 %v1177
    %1466 = vmatprep.subr.mxu0 0.0
    %1467 = vmatpush1.msra.mxu0 %v1178
    %1468 = vmatprep.subr.mxu0 0.0
    %1469 = vmatpush1.msra.mxu0 %v1179
    %1470 = vmatprep.subr.mxu0 0.0
    %1471 = vmatpush1.msra.mxu0 %v1180
    %1472 = vmatprep.subr.mxu0 0.0
    %1473 = vmatpush1.msra.mxu0 %v1181
    %1474 = vmatprep.subr.mxu0 0.0
    %1475 = vmatpush1.msra.mxu0 %v1182
    %1476 = vmatprep.subr.mxu0 0.0
    %1477 = vmatpush1.msra.mxu0 %v1183
    %1478 = vmatprep.subr.mxu0 0.0
    %1479 = vmatpush1.msra.mxu0 %v1184
    %1480 = vmatprep.subr.mxu0 0.0
    %1481 = vmatpush1.msra.mxu0 %v1185
    %1482 = vmatprep.mubr.f32.mxu0 %v1049
    %1483 = vmatmul.mubr.f32.gmra.mrb[0].mxu0 %v1048
    %v1484 = vpop.f32.mrb[0].mxu0
    %v1485 = vadd.f32 %v1410, %v1484
    %v1486 = vpop.f32.mrb[0].mxu0
    %1487 = vmatprep.mubr.f32.mxu0 %v1057
    %1488 = vmatmul.mubr.f32.gmra.mrb[0].mxu0 %v1056
    %v1489 = vpop.f32.mrb[0].mxu0
    %v1490 = vadd.f32 %v1415, %v1489
    %v1491 = vpop.f32.mrb[0].mxu0
    %1492 = vdwg.mxu0
    %v1493 = vlaneseq
    %v1494 = vand.u32 %v1493, 127
    %vm1495 = vcmp.lt.s32.totalorder %v1494, 4
    %vm1496 = vcmp.ge.s32.totalorder %v1494, 4
    %vm1497 = vcmp.lt.s32.totalorder %v1494, 8
    %vm1498 = vmand %vm1496, %vm1497
    %v1499 = vsel %vm1495, %v1485, -1e+30
    %v1500 = vsel %vm1495, %v1490, -1e+30
    %1501 = vmax.xlane.f32.xlu0 %v1499
    %v1502 = vpop.xlane.xlu0 %1501
    %1503 = vmax.xlane.f32.xlu0 %v1500
    %v1504 = vpop.xlane.xlu0 %1503
    %v1505 = vsub.f32 %v1485, %v1502
    %v1506 = vsub.f32 %v1490, %v1504
    %v1507 = vmul.f32 %v1505, 1.442695
    %v1508 = vpow.pop %v1507
    %v1509 = vmul.f32 %v1506, 1.442695
    %v1510 = vpow.pop %v1509
    %v1511 = vsel %vm1495, %v1508, 0.0
    %v1512 = vsel %vm1495, %v1510, 0.0
    %1513 = vadd.xlane.f32.xlu0 %v1511
    %v1514 = vpop.xlane.xlu0 %1513
    %1515 = vadd.xlane.f32.xlu0 %v1512
    %v1516 = vpop.xlane.xlu0 %1515
    %v1517 = vrcp.pop %v1514
    %v1518 = vrcp.pop %v1516
    %v1519 = vmul.f32 %v1511, %v1517
    %v1520 = vmul.f32 %v1512, %v1518
    %v1521 = vlog2.pop %v1514
    %v1522 = vmul.f32 %v1521, 0.6931472
    %v1523 = vlog2.pop %v1516
    %v1524 = vmul.f32 %v1523, 0.6931472
    %v1525 = vsub.f32 %v1505, %v1522
    %v1526 = vsub.f32 %v1506, %v1524
    %v1527 = vsel %vm1498, %v1525, 0.0
    %v1528 = vsel %vm1498, %v1526, 0.0
    %v1529 = vsel %vm1495, %v1525, 0.0
    %v1530 = vsel %vm1495, %v1526, 0.0
    %v1531 = vmul.f32 %v1519, %v1529
    %v1532 = vmul.f32 %v1520, %v1530
    %1533 = vadd.xlane.f32.xlu0 %v1531
    %v1534 = vpop.xlane.xlu0 %1533
    %1535 = vadd.xlane.f32.xlu0 %v1532
    %v1536 = vpop.xlane.xlu0 %1535
    %v1537 = vsub.f32 0.0, %v1534
    %v1538 = vsub.f32 0.0, %v1536
    %vm1539 = vcmp.eq.s32.totalorder %v1494, 8
    %v1540 = vsel %vm1539, %v1485, 0.0
    %v1541 = vsel %vm1539, %v1490, 0.0
    %1542 = vadd.xlane.f32.xlu0 %v1540
    %v1543 = vpop.xlane.xlu0 %1542
    %1544 = vadd.xlane.f32.xlu0 %v1541
    %v1545 = vpop.xlane.xlu0 %1544
    %v1546 = vadd.f32 %v1519, %v1527
    %v1547 = vadd.f32 %v1520, %v1528
    %v1548 = vsel %vm1539, %v1543, 0.0
    %v1549 = vsel %vm1539, %v1545, 0.0
    %v1550 = vadd.f32 %v1546, %v1548
    %v1551 = vadd.f32 %v1547, %v1549
    %vm1552 = vcmp.eq.s32.totalorder %v1494, 9
    %v1553 = vsel %vm1552, %v1537, 0.0
    %v1554 = vsel %vm1552, %v1538, 0.0
    %v1555 = vadd.f32 %v1550, %v1553
    %v1556 = vadd.f32 %v1551, %v1554
    %1557 = vst [vmem:[%s5] sm:$0xff] %v1555
    %1558 = vst [vmem:[%s5 + $0x8] sm:$0xff] %v1556
    // Predicated region
    $region30: #{net_forward.1} parent=1 // pred_check
      _
    $region31: #{net_forward.1} parent=1 // pred_check_branch
      %1560 = sbr.rel (0) target = $region33
    $region32: #{net_forward.1} parent=1 // pred_region
      _
    $region33: #{net_forward.1} parent=1 // pred_fallthru
      _
    // Predicated region
    $region34: #{net_forward.1} parent=1 // pred_check
      _
    $region35: #{net_forward.1} parent=1 // pred_check_branch
      %1562 = sbr.rel (0) target = $region37
    $region36: #{net_forward.1} parent=1 // pred_region
      _
    $region37: #{net_forward.1} parent=1 // pred_fallthru
      _
    %1563 = vsyncpa [#allocation3], 1
    %1564 = vsyncpa [#allocation5], 1

</llo_original>
